<compile_context>
chip_gen: v7x
topology: tpu7x:2x2x1
jax: 0.10.0
libtpu: 0.0.40
codegen_flags: <defaults>
</compile_context>

<pallas_src>
import functools
import math

import jax
import jax.numpy as jnp
from jax import lax
from jax.experimental import pallas as pl
from jax.experimental.pallas import tpu as pltpu


# --------------------------------------------------------------------------
# helpers (trace-time; run inside the kernel)
# --------------------------------------------------------------------------
def _lse(x, axis):
    """Stable logsumexp, keepdims=True."""
    mx = jnp.max(x, axis=axis, keepdims=True)
    return jnp.log(jnp.sum(jnp.exp(x - mx), axis=axis, keepdims=True)) + mx


def _logaddexp(a, b):
    mx = jnp.maximum(a, b)
    return mx + jnp.log(jnp.exp(a - mx) + jnp.exp(b - mx))


# --------------------------------------------------------------------------
# Fused kernel: cluster/score heads + Sinkhorn OT + aggregation + norms
# --------------------------------------------------------------------------
def _fused_kernel(alpha_ref, x_ref, tt_ref,
                  wc1_ref, bc1_ref, wc2_ref, bc2_ref,
                  ws1_ref, bs1_ref, ws2_ref, bs2_ref,
                  ot_ref, oagg_ref, *, iters):
    x = x_ref[0]                                   # [n, D]  (bf16)
    n = x.shape[0]
    m = ws2_ref.shape[1]                           # num_clusters
    alpha = alpha_ref[0, 0]                        # dust-bin scalar (SMEM)

    # ---- cluster head (bf16 MXU matmuls, f32 accumulation) -----------------
    # TODO(synk): nn.Dropout is inference-mode identity (no train-time mask).
    hc = jnp.dot(x, wc1_ref[...], preferred_element_type=jnp.float32)
    hc = jnp.maximum(hc + bc1_ref[...], 0.0).astype(jnp.bfloat16)     # [n, H]
    feats = (jnp.dot(hc, wc2_ref[...], preferred_element_type=jnp.float32)
             + bc2_ref[...]).astype(jnp.bfloat16)                     # [n, l]

    # ---- score head ---------------------------------------------------------
    hs = jnp.dot(x, ws1_ref[...], preferred_element_type=jnp.float32)
    hs = jnp.maximum(hs + bs1_ref[...], 0.0).astype(jnp.bfloat16)     # [n, H]
    scores = (jnp.dot(hs, ws2_ref[...], preferred_element_type=jnp.float32)
              + bs2_ref[...])                                         # [n, m] f32

    # ---- log-space Sinkhorn, token-major [n, m], analytic dust-bin ----------
    norm = jnp.float32(-math.log(m + n))
    # log|n - m| as in torch; large-negative guard (not -inf) when n == m.
    bs_log = (jnp.float32(math.log(abs(n - m))) if n != m
              else jnp.float32(-1e30))
    log_mu_bin = bs_log + norm

    u = jnp.zeros((1, m), jnp.float32)             # cluster duals
    u_bin = jnp.zeros((1, 1), jnp.float32)         # dust-bin dual
    v = jnp.zeros((n, 1), jnp.float32)             # token duals
    E = jnp.zeros_like(scores)
    row_max = jnp.zeros((n, 1), jnp.float32)
    for _ in range(iters):
        # u-step (uses previous v)
        u = norm - _lse(scores + v, axis=0)                           # [1, m]
        u_bin = log_mu_bin - (alpha + _lse(v, axis=0))                # [1, 1]
        # v-step (uses fresh u / u_bin); dust-bin handled via logaddexp
        su = scores + u
        row_max = jnp.max(su, axis=1, keepdims=True)                  # [n, 1]
        E = jnp.exp(su - row_max)                                     # [n, m]
        row_lse = jnp.log(jnp.sum(E, axis=1, keepdims=True)) + row_max
        v = norm - _logaddexp(row_lse, alpha + u_bin)                 # [n, 1]

    # Transport plan (dust-bin row dropped), reusing the last v-step exps:
    #   P = exp(scores + u + v - norm) = E * exp(row_max + v - norm)
    P = E * jnp.exp(row_max + v - norm)                               # [n, m]

    # ---- aggregation (transposed): aggT[i, l] = sum_j P[j, i] * feats[j, l]
    aggT = lax.dot_general(P.astype(jnp.bfloat16), feats,
                           (((0,), (0,)), ((), ())),
                           preferred_element_type=jnp.float32)        # [m, l]

    # F.normalize per cluster (over cluster_dim l = lane axis), via rsqrt.
    css = jnp.sum(aggT * aggT, axis=1, keepdims=True)                 # [m, 1]
    aggT = aggT * lax.rsqrt(jnp.maximum(css, 1e-24))

    # F.normalize(token, dim=-1)  (token features computed outside the kernel)
    tt = tt_ref[0]                                                    # [1, c]
    tss = jnp.sum(tt * tt, axis=-1, keepdims=True)
    t_n = tt * lax.rsqrt(jnp.maximum(tss, 1e-24))

    # final F.normalize over the concatenated descriptor [t_n | agg]
    agg_ss = jnp.sum(jnp.sum(aggT * aggT, axis=1, keepdims=True),
                     axis=0, keepdims=True)                           # [1, 1]
    tot_ss = jnp.sum(t_n * t_n, axis=-1, keepdims=True) + agg_ss      # [1, 1]
    inv = lax.rsqrt(jnp.maximum(tot_ss, 1e-24))

    ot_ref[0] = t_n * inv                                             # [1, c]
    oagg_ref[0] = aggT * inv                                          # [m, l]


# --------------------------------------------------------------------------
# Parameter prep (call ONCE at setup): bf16 casts + dust-bin reshape.
# --------------------------------------------------------------------------
def prepare_params(params):
    wc1, bc1, wc2, bc2 = params["cluster"]
    ws1, bs1, ws2, bs2 = params["score"]
    wt1, bt1, wt2, bt2 = params["token"]
    bf = jnp.bfloat16
    return {
        "cluster": (wc1.astype(bf), bc1.astype(jnp.float32),
                    wc2.astype(bf), bc2.astype(jnp.float32)),
        "score": (ws1.astype(bf), bs1.astype(jnp.float32),
                  ws2.astype(bf), bs2.astype(jnp.float32)),
        # token head runs as a batched XLA matmul outside the kernel; keep f32
        "token": (wt1.astype(jnp.float32), bt1.astype(jnp.float32),
                  wt2.astype(jnp.float32), bt2.astype(jnp.float32)),
        "dust_bin": jnp.reshape(jnp.asarray(params["dust_bin"], jnp.float32),
                                (1, 1)),
    }


def _const_spec(shape):
    """Full-array weight block, constant index_map, single-buffered."""
    return pl.BlockSpec(shape, lambda b: (0,) * len(shape),
                        pipeline_mode=pl.Buffered(1))


# --------------------------------------------------------------------------
# Wrapper: token head in XLA + one fused pallas_call + descriptor assembly
# --------------------------------------------------------------------------
def sinkhorn_aggregator_forward(x, t, prepped, *, num_clusters, cluster_dim,
                                iters=3):
    B, n_tok, D = x.shape
    wc1, bc1, wc2, bc2 = prepped["cluster"]
    ws1, bs1, ws2, bs2 = prepped["score"]
    wt1, bt1, wt2, bt2 = prepped["token"]
    H = wc1.shape[1]
    c = wt2.shape[1]
    l, m = cluster_dim, num_clusters
    alpha = prepped["dust_bin"]

    # Token head: batched XLA GEMM (M=B); only its output enters the kernel.
    tt = jnp.maximum(t @ wt1 + bt1, 0.0) @ wt2 + bt2                  # [B, c]
    tt3 = tt.reshape(B, 1, c)

    xb = x.astype(jnp.bfloat16)

    kernel = functools.partial(_fused_kernel, iters=iters)
    out_t, out_agg = pl.pallas_call(
        kernel,
        out_shape=(jax.ShapeDtypeStruct((B, 1, c), jnp.float32),
                   jax.ShapeDtypeStruct((B, m, l), jnp.float32)),
        grid=(B,),
        in_specs=[
            pl.BlockSpec(memory_space=pltpu.MemorySpace.SMEM),        # dust_bin
            pl.BlockSpec((1, n_tok, D), lambda b: (b, 0, 0)),         # x (bf16)
            pl.BlockSpec((1, 1, c), lambda b: (b, 0, 0)),             # token fts
            _const_spec((D, H)), _const_spec((1, H)),                 # cluster 1
            _const_spec((H, l)), _const_spec((1, l)),                 # cluster 2
            _const_spec((D, H)), _const_spec((1, H)),                 # score 1
            _const_spec((H, m)), _const_spec((1, m)),                 # score 2
        ],
        out_specs=(pl.BlockSpec((1, 1, c), lambda b: (b, 0, 0)),
                   pl.BlockSpec((1, m, l), lambda b: (b, 0, 0))),
        compiler_params=pltpu.CompilerParams(
            dimension_semantics=("parallel",),
            vmem_limit_bytes=48 * 1024 * 1024),
    )(alpha, xb, tt3, wc1, bc1, wc2, bc2, ws1, bs1, ws2, bs2)

    # torch flatten(1) order of the [B, l, m] normalized aggregate.
    agg_lm = jnp.transpose(out_agg, (0, 2, 1)).reshape(B, l * m)
    return jnp.concatenate([out_t.reshape(B, c), agg_lm], axis=-1)


# --------------------------------------------------------------------------
# Pure-JAX reference (mirrors the PyTorch module exactly) for verification
# --------------------------------------------------------------------------
def _forward_ref(x, t, params, *, num_clusters, cluster_dim):
    def mlp_ref(z, w1, b1, w2, b2):
        return jnp.maximum(z @ w1 + b1, 0.0) @ w2 + b2

    B, n_tok, D = x.shape
    m, n = num_clusters, n_tok
    x2d = x.reshape(B * n_tok, D)
    f = mlp_ref(x2d, *params["cluster"]).reshape(B, n_tok, cluster_dim)
    p = mlp_ref(x2d, *params["score"]).reshape(B, n_tok, num_clusters)
    tt = mlp_ref(t, *params["token"])
    f = jnp.transpose(f, (0, 2, 1))
    p = jnp.transpose(p, (0, 2, 1))

    bins = jnp.broadcast_to(params["dust_bin"], (B, 1, n)).astype(jnp.float32)
    Z = jnp.concatenate([p, bins], axis=1)
    norm = -jnp.log(jnp.float32(m + n))
    log_mu = jnp.concatenate(
        [jnp.full((m,), norm), jnp.log(jnp.float32(abs(n - m)))[None] + norm])
    log_nu = jnp.full((n,), norm)
    log_mu = jnp.broadcast_to(log_mu, (B, m + 1))
    log_nu = jnp.broadcast_to(log_nu, (B, n))
    u = jnp.zeros_like(log_mu)
    v = jnp.zeros_like(log_nu)
    for _ in range(3):
        u = log_mu - jax.nn.logsumexp(Z + v[:, None, :], axis=2)
        v = log_nu - jax.nn.logsumexp(Z + u[:, :, None], axis=1)
    Z = Z + u[:, :, None] + v[:, None, :] - norm
    P = jnp.exp(Z)[:, :m, :]
    agg = jnp.einsum("bln,bmn->blm", f, P)
    agg = agg / jnp.maximum(jnp.linalg.norm(agg, axis=1, keepdims=True), 1e-12)
    tn = tt / jnp.maximum(jnp.linalg.norm(tt, axis=-1, keepdims=True), 1e-12)
    desc = jnp.concatenate([tn, agg.reshape(B, -1)], axis=-1)
    return desc / jnp.maximum(jnp.linalg.norm(desc, axis=-1, keepdims=True),
                              1e-12)


# --------------------------------------------------------------------------
if __name__ == "__main__":
    # Small shapes consistent with the module's forward.
    B, n_tok, D = 2, 16, 32          # batch, #tokens, num_channels
    num_clusters = 8                 # m
    cluster_dim = 16                 # l
    token_dim = 8                    # c
    hidden = 512                     # hard-coded in the module

    key = jax.random.PRNGKey(0)
    ks = jax.random.split(key, 8)

    def init_linear(k, din, dout):
        kw, kb = jax.random.split(k)
        bound = 1.0 / (din ** 0.5)
        w = jax.random.uniform(kw, (din, dout), jnp.float32, -bound, bound)
        b = jax.random.uniform(kb, (1, dout), jnp.float32, -bound, bound)
        return w, b

    wc1, bc1 = init_linear(ks[0], D, hidden)
    wc2, bc2 = init_linear(ks[1], hidden, cluster_dim)
    ws1, bs1 = init_linear(ks[2], D, hidden)
    ws2, bs2 = init_linear(ks[3], hidden, num_clusters)
    wt1, bt1 = init_linear(ks[4], D, hidden)
    wt2, bt2 = init_linear(ks[5], hidden, token_dim)

    params = {
        "cluster": (wc1, bc1, wc2, bc2),
        "score": (ws1, bs1, ws2, bs2),
        "token": (wt1, bt1, wt2, bt2),
        "dust_bin": jnp.float32(1.0),
    }
    prepped = prepare_params(params)   # one-time setup (bf16 casts, alpha)

    x = jax.random.normal(ks[6], (B, n_tok, D), jnp.float32)
    t = jax.random.normal(ks[7], (B, D), jnp.float32)

    out = sinkhorn_aggregator_forward(
        x, t, prepped, num_clusters=num_clusters, cluster_dim=cluster_dim)
    out = jax.block_until_ready(out)

    ref = _forward_ref(
        x, t, params, num_clusters=num_clusters, cluster_dim=cluster_dim)
    assert out.shape == (B, token_dim + num_clusters * cluster_dim)
    err = float(jnp.max(jnp.abs(out - ref)))
    assert err < 1.5e-2, f"mismatch vs reference (max abs err {err:.2e})"

    print("KERNEL_OK")
</pallas_src>

<mosaic_0001>
module attributes {stable_mosaic.version = 11 : i64} {
  func.func @_fused_kernel(%arg0: i32, %arg1: memref<1x1xf32, #tpu.memory_space<smem>>, %arg2: memref<1x16x32xbf16, #tpu.memory_space<vmem>>, %arg3: memref<1x1x8xf32, #tpu.memory_space<vmem>>, %arg4: memref<32x512xbf16, #tpu.memory_space<vmem>>, %arg5: memref<1x512xf32, #tpu.memory_space<vmem>>, %arg6: memref<512x16xbf16, #tpu.memory_space<vmem>>, %arg7: memref<1x16xf32, #tpu.memory_space<vmem>>, %arg8: memref<32x512xbf16, #tpu.memory_space<vmem>>, %arg9: memref<1x512xf32, #tpu.memory_space<vmem>>, %arg10: memref<512x8xbf16, #tpu.memory_space<vmem>>, %arg11: memref<1x8xf32, #tpu.memory_space<vmem>>, %arg12: memref<1x1x8xf32, #tpu.memory_space<vmem>>, %arg13: memref<1x8x16xf32, #tpu.memory_space<vmem>>) attributes {dimension_semantics = [#tpu.dimension_semantics<parallel>], iteration_bounds = array<i64: 2>, scalar_prefetch = 0 : i64, scratch_operands = 0 : i64, tpu.core_type = #tpu.core_type<tc>, window_params = [{transform_indices = @transform_0, window_bounds = array<i64: 1, 1>}, {transform_indices = @transform_1, window_bounds = array<i64: 1, 16, 32>}, {transform_indices = @transform_2, window_bounds = array<i64: 1, 1, 8>}, {pipeline_mode = #tpu.pipeline_mode<synchronous>, transform_indices = @transform_3, window_bounds = array<i64: 32, 512>}, {pipeline_mode = #tpu.pipeline_mode<synchronous>, transform_indices = @transform_4, window_bounds = array<i64: 1, 512>}, {pipeline_mode = #tpu.pipeline_mode<synchronous>, transform_indices = @transform_5, window_bounds = array<i64: 512, 16>}, {pipeline_mode = #tpu.pipeline_mode<synchronous>, transform_indices = @transform_6, window_bounds = array<i64: 1, 16>}, {pipeline_mode = #tpu.pipeline_mode<synchronous>, transform_indices = @transform_7, window_bounds = array<i64: 32, 512>}, {pipeline_mode = #tpu.pipeline_mode<synchronous>, transform_indices = @transform_8, window_bounds = array<i64: 1, 512>}, {pipeline_mode = #tpu.pipeline_mode<synchronous>, transform_indices = @transform_9, window_bounds = array<i64: 512, 8>}, {pipeline_mode = #tpu.pipeline_mode<synchronous>, transform_indices = @transform_10, window_bounds = array<i64: 1, 8>}, {transform_indices = @transform_11, window_bounds = array<i64: 1, 1, 8>}, {transform_indices = @transform_12, window_bounds = array<i64: 1, 8, 16>}]} {
    %c0 = arith.constant 0 : index
    %c0_0 = arith.constant 0 : index
    %c0_1 = arith.constant 0 : index
    %0 = vector.load %arg2[%c0, %c0_0, %c0_1] : memref<1x16x32xbf16, #tpu.memory_space<vmem>>, vector<1x16x32xbf16>
    %1 = vector.shape_cast %0 : vector<1x16x32xbf16> to vector<16x32xbf16>
    %c0_2 = arith.constant 0 : index
    %c0_3 = arith.constant 0 : index
    %2 = memref.load %arg1[%c0_2, %c0_3] : memref<1x1xf32, #tpu.memory_space<smem>>
    %c0_4 = arith.constant 0 : index
    %c0_5 = arith.constant 0 : index
    %3 = vector.load %arg4[%c0_4, %c0_5] : memref<32x512xbf16, #tpu.memory_space<vmem>>, vector<32x512xbf16>
    %cst = arith.constant dense<0.000000e+00> : vector<16x512xf32>
    %4 = tpu.matmul %1, %3, %cst {dimension_numbers = #tpu.dot_dimension_numbers<[1], [0], [0], [1], [0, 0, 1, 1], [], []>} : vector<16x32xbf16>, vector<32x512xbf16>, vector<16x512xf32> -> vector<16x512xf32>
    %c0_6 = arith.constant 0 : index
    %c0_7 = arith.constant 0 : index
    %5 = vector.load %arg5[%c0_6, %c0_7] : memref<1x512xf32, #tpu.memory_space<vmem>>, vector<1x512xf32>
    %6 = vector.broadcast %5 : vector<1x512xf32> to vector<16x512xf32>
    %7 = arith.addf %4, %6 : vector<16x512xf32>
    %cst_8 = arith.constant 0.000000e+00 : f32
    %8 = vector.broadcast %cst_8 : f32 to vector<16x512xf32>
    %9 = arith.maximumf %7, %8 : vector<16x512xf32>
    %10 = arith.truncf %9 : vector<16x512xf32> to vector<16x512xbf16>
    %c0_9 = arith.constant 0 : index
    %c0_10 = arith.constant 0 : index
    %11 = vector.load %arg6[%c0_9, %c0_10] : memref<512x16xbf16, #tpu.memory_space<vmem>>, vector<512x16xbf16>
    %cst_11 = arith.constant dense<0.000000e+00> : vector<16x16xf32>
    %12 = tpu.matmul %10, %11, %cst_11 {dimension_numbers = #tpu.dot_dimension_numbers<[1], [0], [0], [1], [0, 0, 1, 1], [], []>} : vector<16x512xbf16>, vector<512x16xbf16>, vector<16x16xf32> -> vector<16x16xf32>
    %c0_12 = arith.constant 0 : index
    %c0_13 = arith.constant 0 : index
    %13 = vector.load %arg7[%c0_12, %c0_13] : memref<1x16xf32, #tpu.memory_space<vmem>>, vector<1x16xf32>
    %14 = vector.broadcast %13 : vector<1x16xf32> to vector<16x16xf32>
    %15 = arith.addf %12, %14 : vector<16x16xf32>
    %16 = arith.truncf %15 : vector<16x16xf32> to vector<16x16xbf16>
    %c0_14 = arith.constant 0 : index
    %c0_15 = arith.constant 0 : index
    %17 = vector.load %arg8[%c0_14, %c0_15] : memref<32x512xbf16, #tpu.memory_space<vmem>>, vector<32x512xbf16>
    %cst_16 = arith.constant dense<0.000000e+00> : vector<16x512xf32>
    %18 = tpu.matmul %1, %17, %cst_16 {dimension_numbers = #tpu.dot_dimension_numbers<[1], [0], [0], [1], [0, 0, 1, 1], [], []>} : vector<16x32xbf16>, vector<32x512xbf16>, vector<16x512xf32> -> vector<16x512xf32>
    %c0_17 = arith.constant 0 : index
    %c0_18 = arith.constant 0 : index
    %19 = vector.load %arg9[%c0_17, %c0_18] : memref<1x512xf32, #tpu.memory_space<vmem>>, vector<1x512xf32>
    %20 = vector.broadcast %19 : vector<1x512xf32> to vector<16x512xf32>
    %21 = arith.addf %18, %20 : vector<16x512xf32>
    %cst_19 = arith.constant 0.000000e+00 : f32
    %22 = vector.broadcast %cst_19 : f32 to vector<16x512xf32>
    %23 = arith.maximumf %21, %22 : vector<16x512xf32>
    %24 = arith.truncf %23 : vector<16x512xf32> to vector<16x512xbf16>
    %c0_20 = arith.constant 0 : index
    %c0_21 = arith.constant 0 : index
    %25 = vector.load %arg10[%c0_20, %c0_21] : memref<512x8xbf16, #tpu.memory_space<vmem>>, vector<512x8xbf16>
    %cst_22 = arith.constant dense<0.000000e+00> : vector<16x8xf32>
    %26 = tpu.matmul %24, %25, %cst_22 {dimension_numbers = #tpu.dot_dimension_numbers<[1], [0], [0], [1], [0, 0, 1, 1], [], []>} : vector<16x512xbf16>, vector<512x8xbf16>, vector<16x8xf32> -> vector<16x8xf32>
    %c0_23 = arith.constant 0 : index
    %c0_24 = arith.constant 0 : index
    %27 = vector.load %arg11[%c0_23, %c0_24] : memref<1x8xf32, #tpu.memory_space<vmem>>, vector<1x8xf32>
    %28 = vector.broadcast %27 : vector<1x8xf32> to vector<16x8xf32>
    %29 = arith.addf %26, %28 : vector<16x8xf32>
    %cst_25 = arith.constant 2.07944155 : f32
    %cst_26 = arith.constant -3.17805386 : f32
    %30 = arith.addf %cst_25, %cst_26 : f32
    %cst_27 = arith.constant 0.000000e+00 : f32
    %31 = vector.broadcast %cst_27 : f32 to vector<16x1xf32>
    %32 = vector.broadcast %31 : vector<16x1xf32> to vector<16x8xf32>
    %33 = arith.addf %29, %32 : vector<16x8xf32>
    %cst_28 = arith.constant dense<0xFF800000> : vector<8xf32>
    %34 = vector.multi_reduction <maximumf>, %33, %cst_28 [0] : vector<16x8xf32> to vector<8xf32>
    %35 = vector.shape_cast %34 : vector<8xf32> to vector<1x8xf32>
    %36 = vector.broadcast %35 : vector<1x8xf32> to vector<16x8xf32>
    %37 = arith.subf %33, %36 : vector<16x8xf32>
    %38 = math.exp %37 : vector<16x8xf32>
    %cst_29 = arith.constant dense<0.000000e+00> : vector<8xf32>
    %39 = vector.multi_reduction <add>, %38, %cst_29 [0] : vector<16x8xf32> to vector<8xf32>
    %40 = vector.shape_cast %39 : vector<8xf32> to vector<1x8xf32>
    %41 = math.log %40 : vector<1x8xf32>
    %42 = arith.addf %41, %35 : vector<1x8xf32>
    %cst_30 = arith.constant -3.17805386 : f32
    %43 = vector.broadcast %cst_30 : f32 to vector<1x8xf32>
    %44 = arith.subf %43, %42 : vector<1x8xf32>
    %cst_31 = arith.constant dense<0xFF800000> : vector<1xf32>
    %45 = vector.multi_reduction <maximumf>, %31, %cst_31 [0] : vector<16x1xf32> to vector<1xf32>
    %46 = vector.shape_cast %45 : vector<1xf32> to vector<1x1xf32>
    %47 = vector.broadcast %46 : vector<1x1xf32> to vector<16x1xf32>
    %48 = arith.subf %31, %47 : vector<16x1xf32>
    %49 = math.exp %48 : vector<16x1xf32>
    %cst_32 = arith.constant dense<0.000000e+00> : vector<1xf32>
    %50 = vector.multi_reduction <add>, %49, %cst_32 [0] : vector<16x1xf32> to vector<1xf32>
    %51 = vector.shape_cast %50 : vector<1xf32> to vector<1x1xf32>
    %52 = math.log %51 : vector<1x1xf32>
    %53 = arith.addf %52, %46 : vector<1x1xf32>
    %54 = vector.broadcast %2 : f32 to vector<1x1xf32>
    %55 = arith.addf %54, %53 : vector<1x1xf32>
    %56 = vector.broadcast %30 : f32 to vector<1x1xf32>
    %57 = arith.subf %56, %55 : vector<1x1xf32>
    %58 = vector.broadcast %44 : vector<1x8xf32> to vector<16x8xf32>
    %59 = arith.addf %29, %58 : vector<16x8xf32>
    %cst_33 = arith.constant dense<0xFF800000> : vector<16xf32>
    %60 = vector.multi_reduction <maximumf>, %59, %cst_33 [1] : vector<16x8xf32> to vector<16xf32>
    %61 = vector.shape_cast %60 : vector<16xf32> to vector<16x1xf32>
    %62 = vector.broadcast %61 : vector<16x1xf32> to vector<16x8xf32>
    %63 = arith.subf %59, %62 : vector<16x8xf32>
    %64 = math.exp %63 : vector<16x8xf32>
    %cst_34 = arith.constant dense<0.000000e+00> : vector<16xf32>
    %65 = vector.multi_reduction <add>, %64, %cst_34 [1] : vector<16x8xf32> to vector<16xf32>
    %66 = vector.shape_cast %65 : vector<16xf32> to vector<16x1xf32>
    %67 = math.log %66 : vector<16x1xf32>
    %68 = arith.addf %67, %61 : vector<16x1xf32>
    %69 = vector.broadcast %2 : f32 to vector<1x1xf32>
    %70 = arith.addf %69, %57 : vector<1x1xf32>
    %71 = vector.broadcast %70 : vector<1x1xf32> to vector<16x1xf32>
    %72 = arith.maximumf %68, %71 : vector<16x1xf32>
    %73 = arith.subf %68, %72 : vector<16x1xf32>
    %74 = math.exp %73 : vector<16x1xf32>
    %75 = vector.broadcast %70 : vector<1x1xf32> to vector<16x1xf32>
    %76 = arith.subf %75, %72 : vector<16x1xf32>
    %77 = math.exp %76 : vector<16x1xf32>
    %78 = arith.addf %74, %77 : vector<16x1xf32>
    %79 = math.log %78 : vector<16x1xf32>
    %80 = arith.addf %72, %79 : vector<16x1xf32>
    %cst_35 = arith.constant -3.17805386 : f32
    %81 = vector.broadcast %cst_35 : f32 to vector<16x1xf32>
    %82 = arith.subf %81, %80 : vector<16x1xf32>
    %83 = vector.broadcast %82 : vector<16x1xf32> to vector<16x8xf32>
    %84 = arith.addf %29, %83 : vector<16x8xf32>
    %cst_36 = arith.constant dense<0xFF800000> : vector<8xf32>
    %85 = vector.multi_reduction <maximumf>, %84, %cst_36 [0] : vector<16x8xf32> to vector<8xf32>
    %86 = vector.shape_cast %85 : vector<8xf32> to vector<1x8xf32>
    %87 = vector.broadcast %86 : vector<1x8xf32> to vector<16x8xf32>
    %88 = arith.subf %84, %87 : vector<16x8xf32>
    %89 = math.exp %88 : vector<16x8xf32>
    %cst_37 = arith.constant dense<0.000000e+00> : vector<8xf32>
    %90 = vector.multi_reduction <add>, %89, %cst_37 [0] : vector<16x8xf32> to vector<8xf32>
    %91 = vector.shape_cast %90 : vector<8xf32> to vector<1x8xf32>
    %92 = math.log %91 : vector<1x8xf32>
    %93 = arith.addf %92, %86 : vector<1x8xf32>
    %cst_38 = arith.constant -3.17805386 : f32
    %94 = vector.broadcast %cst_38 : f32 to vector<1x8xf32>
    %95 = arith.subf %94, %93 : vector<1x8xf32>
    %cst_39 = arith.constant dense<0xFF800000> : vector<1xf32>
    %96 = vector.multi_reduction <maximumf>, %82, %cst_39 [0] : vector<16x1xf32> to vector<1xf32>
    %97 = vector.shape_cast %96 : vector<1xf32> to vector<1x1xf32>
    %98 = vector.broadcast %97 : vector<1x1xf32> to vector<16x1xf32>
    %99 = arith.subf %82, %98 : vector<16x1xf32>
    %100 = math.exp %99 : vector<16x1xf32>
    %cst_40 = arith.constant dense<0.000000e+00> : vector<1xf32>
    %101 = vector.multi_reduction <add>, %100, %cst_40 [0] : vector<16x1xf32> to vector<1xf32>
    %102 = vector.shape_cast %101 : vector<1xf32> to vector<1x1xf32>
    %103 = math.log %102 : vector<1x1xf32>
    %104 = arith.addf %103, %97 : vector<1x1xf32>
    %105 = vector.broadcast %2 : f32 to vector<1x1xf32>
    %106 = arith.addf %105, %104 : vector<1x1xf32>
    %107 = vector.broadcast %30 : f32 to vector<1x1xf32>
    %108 = arith.subf %107, %106 : vector<1x1xf32>
    %109 = vector.broadcast %95 : vector<1x8xf32> to vector<16x8xf32>
    %110 = arith.addf %29, %109 : vector<16x8xf32>
    %cst_41 = arith.constant dense<0xFF800000> : vector<16xf32>
    %111 = vector.multi_reduction <maximumf>, %110, %cst_41 [1] : vector<16x8xf32> to vector<16xf32>
    %112 = vector.shape_cast %111 : vector<16xf32> to vector<16x1xf32>
    %113 = vector.broadcast %112 : vector<16x1xf32> to vector<16x8xf32>
    %114 = arith.subf %110, %113 : vector<16x8xf32>
    %115 = math.exp %114 : vector<16x8xf32>
    %cst_42 = arith.constant dense<0.000000e+00> : vector<16xf32>
    %116 = vector.multi_reduction <add>, %115, %cst_42 [1] : vector<16x8xf32> to vector<16xf32>
    %117 = vector.shape_cast %116 : vector<16xf32> to vector<16x1xf32>
    %118 = math.log %117 : vector<16x1xf32>
    %119 = arith.addf %118, %112 : vector<16x1xf32>
    %120 = vector.broadcast %2 : f32 to vector<1x1xf32>
    %121 = arith.addf %120, %108 : vector<1x1xf32>
    %122 = vector.broadcast %121 : vector<1x1xf32> to vector<16x1xf32>
    %123 = arith.maximumf %119, %122 : vector<16x1xf32>
    %124 = arith.subf %119, %123 : vector<16x1xf32>
    %125 = math.exp %124 : vector<16x1xf32>
    %126 = vector.broadcast %121 : vector<1x1xf32> to vector<16x1xf32>
    %127 = arith.subf %126, %123 : vector<16x1xf32>
    %128 = math.exp %127 : vector<16x1xf32>
    %129 = arith.addf %125, %128 : vector<16x1xf32>
    %130 = math.log %129 : vector<16x1xf32>
    %131 = arith.addf %123, %130 : vector<16x1xf32>
    %cst_43 = arith.constant -3.17805386 : f32
    %132 = vector.broadcast %cst_43 : f32 to vector<16x1xf32>
    %133 = arith.subf %132, %131 : vector<16x1xf32>
    %134 = vector.broadcast %133 : vector<16x1xf32> to vector<16x8xf32>
    %135 = arith.addf %29, %134 : vector<16x8xf32>
    %cst_44 = arith.constant dense<0xFF800000> : vector<8xf32>
    %136 = vector.multi_reduction <maximumf>, %135, %cst_44 [0] : vector<16x8xf32> to vector<8xf32>
    %137 = vector.shape_cast %136 : vector<8xf32> to vector<1x8xf32>
    %138 = vector.broadcast %137 : vector<1x8xf32> to vector<16x8xf32>
    %139 = arith.subf %135, %138 : vector<16x8xf32>
    %140 = math.exp %139 : vector<16x8xf32>
    %cst_45 = arith.constant dense<0.000000e+00> : vector<8xf32>
    %141 = vector.multi_reduction <add>, %140, %cst_45 [0] : vector<16x8xf32> to vector<8xf32>
    %142 = vector.shape_cast %141 : vector<8xf32> to vector<1x8xf32>
    %143 = math.log %142 : vector<1x8xf32>
    %144 = arith.addf %143, %137 : vector<1x8xf32>
    %cst_46 = arith.constant -3.17805386 : f32
    %145 = vector.broadcast %cst_46 : f32 to vector<1x8xf32>
    %146 = arith.subf %145, %144 : vector<1x8xf32>
    %cst_47 = arith.constant dense<0xFF800000> : vector<1xf32>
    %147 = vector.multi_reduction <maximumf>, %133, %cst_47 [0] : vector<16x1xf32> to vector<1xf32>
    %148 = vector.shape_cast %147 : vector<1xf32> to vector<1x1xf32>
    %149 = vector.broadcast %148 : vector<1x1xf32> to vector<16x1xf32>
    %150 = arith.subf %133, %149 : vector<16x1xf32>
    %151 = math.exp %150 : vector<16x1xf32>
    %cst_48 = arith.constant dense<0.000000e+00> : vector<1xf32>
    %152 = vector.multi_reduction <add>, %151, %cst_48 [0] : vector<16x1xf32> to vector<1xf32>
    %153 = vector.shape_cast %152 : vector<1xf32> to vector<1x1xf32>
    %154 = math.log %153 : vector<1x1xf32>
    %155 = arith.addf %154, %148 : vector<1x1xf32>
    %156 = vector.broadcast %2 : f32 to vector<1x1xf32>
    %157 = arith.addf %156, %155 : vector<1x1xf32>
    %158 = vector.broadcast %30 : f32 to vector<1x1xf32>
    %159 = arith.subf %158, %157 : vector<1x1xf32>
    %160 = vector.broadcast %146 : vector<1x8xf32> to vector<16x8xf32>
    %161 = arith.addf %29, %160 : vector<16x8xf32>
    %cst_49 = arith.constant dense<0xFF800000> : vector<16xf32>
    %162 = vector.multi_reduction <maximumf>, %161, %cst_49 [1] : vector<16x8xf32> to vector<16xf32>
    %163 = vector.shape_cast %162 : vector<16xf32> to vector<16x1xf32>
    %164 = vector.broadcast %163 : vector<16x1xf32> to vector<16x8xf32>
    %165 = arith.subf %161, %164 : vector<16x8xf32>
    %166 = math.exp %165 : vector<16x8xf32>
    %cst_50 = arith.constant dense<0.000000e+00> : vector<16xf32>
    %167 = vector.multi_reduction <add>, %166, %cst_50 [1] : vector<16x8xf32> to vector<16xf32>
    %168 = vector.shape_cast %167 : vector<16xf32> to vector<16x1xf32>
    %169 = math.log %168 : vector<16x1xf32>
    %170 = arith.addf %169, %163 : vector<16x1xf32>
    %171 = vector.broadcast %2 : f32 to vector<1x1xf32>
    %172 = arith.addf %171, %159 : vector<1x1xf32>
    %173 = vector.broadcast %172 : vector<1x1xf32> to vector<16x1xf32>
    %174 = arith.maximumf %170, %173 : vector<16x1xf32>
    %175 = arith.subf %170, %174 : vector<16x1xf32>
    %176 = math.exp %175 : vector<16x1xf32>
    %177 = vector.broadcast %172 : vector<1x1xf32> to vector<16x1xf32>
    %178 = arith.subf %177, %174 : vector<16x1xf32>
    %179 = math.exp %178 : vector<16x1xf32>
    %180 = arith.addf %176, %179 : vector<16x1xf32>
    %181 = math.log %180 : vector<16x1xf32>
    %182 = arith.addf %174, %181 : vector<16x1xf32>
    %cst_51 = arith.constant -3.17805386 : f32
    %183 = vector.broadcast %cst_51 : f32 to vector<16x1xf32>
    %184 = arith.subf %183, %182 : vector<16x1xf32>
    %185 = arith.addf %163, %184 : vector<16x1xf32>
    %cst_52 = arith.constant -3.17805386 : f32
    %186 = vector.broadcast %cst_52 : f32 to vector<16x1xf32>
    %187 = arith.subf %185, %186 : vector<16x1xf32>
    %188 = math.exp %187 : vector<16x1xf32>
    %189 = vector.broadcast %188 : vector<16x1xf32> to vector<16x8xf32>
    %190 = arith.mulf %166, %189 : vector<16x8xf32>
    %191 = arith.truncf %190 : vector<16x8xf32> to vector<16x8xbf16>
    %cst_53 = arith.constant dense<0.000000e+00> : vector<8x16xf32>
    %192 = tpu.matmul %191, %16, %cst_53 {dimension_numbers = #tpu.dot_dimension_numbers<[0], [0], [1], [1], [0, 1, 1, 1], [], []>} : vector<16x8xbf16>, vector<16x16xbf16>, vector<8x16xf32> -> vector<8x16xf32>
    %193 = arith.mulf %192, %192 : vector<8x16xf32>
    %cst_54 = arith.constant dense<0.000000e+00> : vector<8xf32>
    %194 = vector.multi_reduction <add>, %193, %cst_54 [1] : vector<8x16xf32> to vector<8xf32>
    %195 = vector.shape_cast %194 : vector<8xf32> to vector<8x1xf32>
    %cst_55 = arith.constant 1.000000e-24 : f32
    %196 = vector.broadcast %cst_55 : f32 to vector<8x1xf32>
    %197 = arith.maximumf %195, %196 : vector<8x1xf32>
    %198 = math.rsqrt %197 : vector<8x1xf32>
    %199 = vector.broadcast %198 : vector<8x1xf32> to vector<8x16xf32>
    %200 = arith.mulf %192, %199 : vector<8x16xf32>
    %c0_56 = arith.constant 0 : index
    %c0_57 = arith.constant 0 : index
    %c0_58 = arith.constant 0 : index
    %201 = vector.load %arg3[%c0_56, %c0_57, %c0_58] : memref<1x1x8xf32, #tpu.memory_space<vmem>>, vector<1x1x8xf32>
    %202 = vector.shape_cast %201 : vector<1x1x8xf32> to vector<1x8xf32>
    %203 = arith.mulf %202, %202 : vector<1x8xf32>
    %cst_59 = arith.constant dense<0.000000e+00> : vector<1xf32>
    %204 = vector.multi_reduction <add>, %203, %cst_59 [1] : vector<1x8xf32> to vector<1xf32>
    %205 = vector.shape_cast %204 : vector<1xf32> to vector<1x1xf32>
    %cst_60 = arith.constant 1.000000e-24 : f32
    %206 = vector.broadcast %cst_60 : f32 to vector<1x1xf32>
    %207 = arith.maximumf %205, %206 : vector<1x1xf32>
    %208 = math.rsqrt %207 : vector<1x1xf32>
    %209 = vector.broadcast %208 : vector<1x1xf32> to vector<1x8xf32>
    %210 = arith.mulf %202, %209 : vector<1x8xf32>
    %211 = arith.mulf %200, %200 : vector<8x16xf32>
    %cst_61 = arith.constant dense<0.000000e+00> : vector<8xf32>
    %212 = vector.multi_reduction <add>, %211, %cst_61 [1] : vector<8x16xf32> to vector<8xf32>
    %213 = vector.shape_cast %212 : vector<8xf32> to vector<8x1xf32>
    %cst_62 = arith.constant dense<0.000000e+00> : vector<1xf32>
    %214 = vector.multi_reduction <add>, %213, %cst_62 [0] : vector<8x1xf32> to vector<1xf32>
    %215 = vector.shape_cast %214 : vector<1xf32> to vector<1x1xf32>
    %216 = arith.mulf %210, %210 : vector<1x8xf32>
    %cst_63 = arith.constant dense<0.000000e+00> : vector<1xf32>
    %217 = vector.multi_reduction <add>, %216, %cst_63 [1] : vector<1x8xf32> to vector<1xf32>
    %218 = vector.shape_cast %217 : vector<1xf32> to vector<1x1xf32>
    %219 = arith.addf %218, %215 : vector<1x1xf32>
    %cst_64 = arith.constant 1.000000e-24 : f32
    %220 = vector.broadcast %cst_64 : f32 to vector<1x1xf32>
    %221 = arith.maximumf %219, %220 : vector<1x1xf32>
    %222 = math.rsqrt %221 : vector<1x1xf32>
    %223 = vector.broadcast %222 : vector<1x1xf32> to vector<1x8xf32>
    %224 = arith.mulf %210, %223 : vector<1x8xf32>
    %c0_65 = arith.constant 0 : index
    %c0_66 = arith.constant 0 : index
    %c0_67 = arith.constant 0 : index
    %225 = vector.load %arg12[%c0_65, %c0_66, %c0_67] : memref<1x1x8xf32, #tpu.memory_space<vmem>>, vector<1x1x8xf32>
    %226 = vector.shape_cast %225 : vector<1x1x8xf32> to vector<1x8xf32>
    %227 = vector.shape_cast %224 : vector<1x8xf32> to vector<1x1x8xf32>
    tpu.vector_store %arg12[%c0_65, %c0_66, %c0_67], %227 {strides = array<i32>} : memref<1x1x8xf32, #tpu.memory_space<vmem>>, vector<1x1x8xf32>,
    %228 = vector.broadcast %222 : vector<1x1xf32> to vector<8x16xf32>
    %229 = arith.mulf %200, %228 : vector<8x16xf32>
    %c0_68 = arith.constant 0 : index
    %c0_69 = arith.constant 0 : index
    %c0_70 = arith.constant 0 : index
    %230 = vector.load %arg13[%c0_68, %c0_69, %c0_70] : memref<1x8x16xf32, #tpu.memory_space<vmem>>, vector<1x8x16xf32>
    %231 = vector.shape_cast %230 : vector<1x8x16xf32> to vector<8x16xf32>
    %232 = vector.shape_cast %229 : vector<8x16xf32> to vector<1x8x16xf32>
    tpu.vector_store %arg13[%c0_68, %c0_69, %c0_70], %232 {strides = array<i32>} : memref<1x8x16xf32, #tpu.memory_space<vmem>>, vector<1x8x16xf32>,
    return
  }
  func.func @transform_0(%arg0: i32) -> (i32, i32) {
    %c0_i32 = arith.constant 0 : i32
    %c0_i32_0 = arith.constant 0 : i32
    %c0_i32_1 = arith.constant 0 : i32
    return %c0_i32, %c0_i32_0 : i32, i32
  }
  func.func @transform_1(%arg0: i32) -> (i32, i32, i32) {
    %c0_i32 = arith.constant 0 : i32
    %c0_i32_0 = arith.constant 0 : i32
    %c0_i32_1 = arith.constant 0 : i32
    return %arg0, %c0_i32, %c0_i32_0 : i32, i32, i32
  }
  func.func @transform_2(%arg0: i32) -> (i32, i32, i32) {
    %c0_i32 = arith.constant 0 : i32
    %c0_i32_0 = arith.constant 0 : i32
    %c0_i32_1 = arith.constant 0 : i32
    return %arg0, %c0_i32, %c0_i32_0 : i32, i32, i32
  }
  func.func @transform_3(%arg0: i32) -> (i32, i32) {
    %c0_i32 = arith.constant 0 : i32
    %c0_i32_0 = arith.constant 0 : i32
    %c0_i32_1 = arith.constant 0 : i32
    return %c0_i32, %c0_i32_0 : i32, i32
  }
  func.func @transform_4(%arg0: i32) -> (i32, i32) {
    %c0_i32 = arith.constant 0 : i32
    %c0_i32_0 = arith.constant 0 : i32
    %c0_i32_1 = arith.constant 0 : i32
    return %c0_i32, %c0_i32_0 : i32, i32
  }
  func.func @transform_5(%arg0: i32) -> (i32, i32) {
    %c0_i32 = arith.constant 0 : i32
    %c0_i32_0 = arith.constant 0 : i32
    %c0_i32_1 = arith.constant 0 : i32
    return %c0_i32, %c0_i32_0 : i32, i32
  }
  func.func @transform_6(%arg0: i32) -> (i32, i32) {
    %c0_i32 = arith.constant 0 : i32
    %c0_i32_0 = arith.constant 0 : i32
    %c0_i32_1 = arith.constant 0 : i32
    return %c0_i32, %c0_i32_0 : i32, i32
  }
  func.func @transform_7(%arg0: i32) -> (i32, i32) {
    %c0_i32 = arith.constant 0 : i32
    %c0_i32_0 = arith.constant 0 : i32
    %c0_i32_1 = arith.constant 0 : i32
    return %c0_i32, %c0_i32_0 : i32, i32
  }
  func.func @transform_8(%arg0: i32) -> (i32, i32) {
    %c0_i32 = arith.constant 0 : i32
    %c0_i32_0 = arith.constant 0 : i32
    %c0_i32_1 = arith.constant 0 : i32
    return %c0_i32, %c0_i32_0 : i32, i32
  }
  func.func @transform_9(%arg0: i32) -> (i32, i32) {
    %c0_i32 = arith.constant 0 : i32
    %c0_i32_0 = arith.constant 0 : i32
    %c0_i32_1 = arith.constant 0 : i32
    return %c0_i32, %c0_i32_0 : i32, i32
  }
  func.func @transform_10(%arg0: i32) -> (i32, i32) {
    %c0_i32 = arith.constant 0 : i32
    %c0_i32_0 = arith.constant 0 : i32
    %c0_i32_1 = arith.constant 0 : i32
    return %c0_i32, %c0_i32_0 : i32, i32
  }
  func.func @transform_11(%arg0: i32) -> (i32, i32, i32) {
    %c0_i32 = arith.constant 0 : i32
    %c0_i32_0 = arith.constant 0 : i32
    %c0_i32_1 = arith.constant 0 : i32
    return %arg0, %c0_i32, %c0_i32_0 : i32, i32, i32
  }
  func.func @transform_12(%arg0: i32) -> (i32, i32, i32) {
    %c0_i32 = arith.constant 0 : i32
    %c0_i32_0 = arith.constant 0 : i32
    %c0_i32_1 = arith.constant 0 : i32
    return %arg0, %c0_i32, %c0_i32_0 : i32, i32, i32
  }
}

</mosaic_0001>

<llo_original>
// kernel: tpu_custom_call.1
$region0: #{tpu_custom_call.1}
  #allocation0 [shape = 'u32[]', space=smem, size = 0x4, offset = 0x4, fixed_abs, tag = 'smem constant byte address 0x4 - core index']
  #allocation1 [shape = 'u32[144,128]{1,0:T(1,128)}', space=vmem, size = 0x12000, scoped, tag = 'internal scratch']
  #allocation2 [shape = 'f32[1,1]{1,0:T(1,128)S(6)}', space=smem, size = 0x200, scoped, tag = 'scoped memory for tpu_custom_call.1']
  %s0 = inlined_call_operand.<no memory space> [shape: f32[1,1], index: 0, kind: input, shape index: {}]
  %s1 = inlined_call_operand.vmem [shape: bf16[2,16,32], index: 1, kind: input, shape index: {}]
  %s2 = inlined_call_operand.vmem [shape: f32[2,1,8], index: 2, kind: input, shape index: {}]
  %s3 = inlined_call_operand.vmem [shape: bf16[32,512], index: 3, kind: input, shape index: {}]
  %s4 = inlined_call_operand.vmem [shape: f32[1,512], index: 4, kind: input, shape index: {}]
  %s5 = inlined_call_operand.vmem [shape: bf16[512,16], index: 5, kind: input, shape index: {}]
  %s6 = inlined_call_operand.vmem [shape: f32[1,16], index: 6, kind: input, shape index: {}]
  %s7 = inlined_call_operand.vmem [shape: bf16[32,512], index: 7, kind: input, shape index: {}]
  %s8 = inlined_call_operand.vmem [shape: f32[1,512], index: 8, kind: input, shape index: {}]
  %s9 = inlined_call_operand.vmem [shape: bf16[512,8], index: 9, kind: input, shape index: {}]
  %s10 = inlined_call_operand.vmem [shape: f32[1,8], index: 10, kind: input, shape index: {}]
  %s11 = inlined_call_operand.hbm [shape: f32[2,1,8], index: 11, kind: output, shape index: {0}]
  %s12 = inlined_call_operand.hbm [shape: f32[2,8,16], index: 12, kind: output, shape index: {1}]
  %13 = xla_tuple %s11, %s12
  %s14 = sld [smem:[#allocation0]]
  $region85: #{tpu_custom_call.1} parent=0
    _
  %s16 = ssub.s32 1, %s14
  %s17 = scalar_select 0, %s16, %s14
  %18 = sst [smem:[#allocation2]] %s0
  $region1: #{tpu_custom_call.1} parent=0
    #allocation3 [shape = 'u8[1024]{0}', space=vmem, size = 0x400, scoped, tag = 'output window, operand 0']
    #allocation4 [shape = 's32[2]{0}', space=sflag, size = 0x8, scoped, tag = 'scoped memory for tpu_custom_call.1']
    #allocation5 [shape = 'u8[8192]{0}', space=vmem, size = 0x2000, scoped, tag = 'output window, operand 1']
    #allocation6 [shape = 's32[2]{0}', space=sflag, size = 0x8, scoped, tag = 'scoped memory for tpu_custom_call.1']
    %19 = vsyncpa [#allocation4], 0
    %s20 = scalar_lea.sflag [#allocation4], 1
    %21 = vsyncpa %s20, 0
    %22 = vsyncpa [#allocation6], 0
    %s23 = scalar_lea.sflag [#allocation6], 1
    %24 = vsyncpa %s23, 0
    loop: start=0, step=1, limit=4
    $region2: #{tpu_custom_call.1} parent=1 // loop_pre_header
      _
    $region3: #{tpu_custom_call.1} parent=1 // loop_header
      %s26 = sphi 0, %s30
      %p27 = scmp.ge.s32.totalorder %s26, 4
      %s34 = sphi 0, %s34
      %s36 = sphi 0, %s34
      %s37 = sphi 0, %s36
      %s51 = sphi 0, %s37
      %s57 = sphi 0, %s59
      %s60 = sphi 0, %s57
      %s61 = sphi 0, %s60
      %s77 = sphi 0, %s61
      %s83 = sphi 0, %s85
      %s86 = sphi 0, %s83
      %s87 = sphi 0, %s86
      %s103 = sphi 0, %s87
      %s107 = sphi 0, %s107
      %s109 = sphi 0, %s107
      %s110 = sphi 0, %s109
      %s124 = sphi 0, %s110
      %s128 = sphi 0, %s128
      %s130 = sphi 0, %s128
      %s131 = sphi 0, %s130
      %s145 = sphi 0, %s131
      %s149 = sphi 0, %s149
      %s151 = sphi 0, %s149
      %s152 = sphi 0, %s151
      %s166 = sphi 0, %s152
      %s170 = sphi 0, %s170
      %s172 = sphi 0, %s170
      %s173 = sphi 0, %s172
      %s187 = sphi 0, %s173
      %s191 = sphi 0, %s191
      %s193 = sphi 0, %s191
      %s194 = sphi 0, %s193
      %s208 = sphi 0, %s194
      %s212 = sphi 0, %s212
      %s214 = sphi 0, %s212
      %s215 = sphi 0, %s214
      %s229 = sphi 0, %s215
      %s233 = sphi 0, %s233
      %s235 = sphi 0, %s233
      %s236 = sphi 0, %s235
      %s250 = sphi 0, %s236
      %s254 = sphi 0, %s254
      %s256 = sphi 0, %s254
      %s257 = sphi 0, %s256
      %s271 = sphi 0, %s257
      %s277 = sphi 0, %s279
      %s280 = sphi 0, %s277
      %s281 = sphi 0, %s280
      %s297 = sphi 0, %s281
      %s303 = sphi 0, %s305
      %s306 = sphi 0, %s303
      %s307 = sphi 0, %s306
      %s323 = sphi 0, %s307
    $region4: #{tpu_custom_call.1} parent=1 // loop_header_branch
      %29 = sbr.rel (%p27) target = $region8
    $region5: #{tpu_custom_call.1} parent=1 // loop_body
      %s31 = ssub.s32 %s26, 1
      %s32 = ssub.s32 %s26, 2
      %s33 = sadd.s32 %s26, 1
      %s35 = sadd.s32 %s34, 1
      %p38 = scmp.eq.s32.totalorder %s26, 1
      %p39 = scmp.ne.s32.totalorder %s34, %s36
      %p40 = scmp.eq.s32.totalorder %s26, 0
      %p41 = por %p39, %p40
      %p42 = scmp.ne.s32.totalorder %s34, %s36
      %p43 = scmp.eq.s32.totalorder %s31, 1
      %p44 = por %p42, %p43
      %p45 = scmp.ne.s32.totalorder %s36, %s37
      %p46 = scmp.eq.s32.totalorder %s31, 0
      %p47 = por %p45, %p46
      %p48 = scmp.ne.s32.totalorder %s36, %s37
      %p49 = scmp.eq.s32.totalorder %s32, 1
      %p50 = por %p48, %p49
      %p52 = scmp.ne.s32.totalorder %s37, %s51
      %p53 = scmp.eq.s32.totalorder %s32, 0
      %p54 = por %p52, %p53
      %s55 = ssub.s32 %s26, %s33
      %p56 = scmp.eq.s32.totalorder %s55, 0
      %s58 = sadd.s32 %s57, 1
      %s59 = scalar_select %p56, %s57, %s58
      %p62 = pneg %p56
      %p63 = scmp.eq.s32.totalorder %s26, 1
      %p64 = por %p62, %p63
      %p65 = scmp.ne.s32.totalorder %s57, %s60
      %p66 = scmp.eq.s32.totalorder %s26, 0
      %p67 = por %p65, %p66
      %p68 = scmp.ne.s32.totalorder %s57, %s60
      %p69 = scmp.eq.s32.totalorder %s31, 1
      %p70 = por %p68, %p69
      %p71 = scmp.ne.s32.totalorder %s60, %s61
      %p72 = scmp.eq.s32.totalorder %s31, 0
      %p73 = por %p71, %p72
      %p74 = scmp.ne.s32.totalorder %s60, %s61
      %p75 = scmp.eq.s32.totalorder %s32, 1
      %p76 = por %p74, %p75
      %p78 = scmp.ne.s32.totalorder %s61, %s77
      %p79 = scmp.eq.s32.totalorder %s32, 0
      %p80 = por %p78, %p79
      %s81 = ssub.s32 %s26, %s33
      %p82 = scmp.eq.s32.totalorder %s81, 0
      %s84 = sadd.s32 %s83, 1
      %s85 = scalar_select %p82, %s83, %s84
      %p88 = pneg %p82
      %p89 = scmp.eq.s32.totalorder %s26, 1
      %p90 = por %p88, %p89
      %p91 = scmp.ne.s32.totalorder %s83, %s86
      %p92 = scmp.eq.s32.totalorder %s26, 0
      %p93 = por %p91, %p92
      %p94 = scmp.ne.s32.totalorder %s83, %s86
      %p95 = scmp.eq.s32.totalorder %s31, 1
      %p96 = por %p94, %p95
      %p97 = scmp.ne.s32.totalorder %s86, %s87
      %p98 = scmp.eq.s32.totalorder %s31, 0
      %p99 = por %p97, %p98
      %p100 = scmp.ne.s32.totalorder %s86, %s87
      %p101 = scmp.eq.s32.totalorder %s32, 1
      %p102 = por %p100, %p101
      %p104 = scmp.ne.s32.totalorder %s87, %s103
      %p105 = scmp.eq.s32.totalorder %s32, 0
      %p106 = por %p104, %p105
      %s108 = sadd.s32 %s107, 1
      %p111 = scmp.eq.s32.totalorder %s26, 1
      %p112 = scmp.ne.s32.totalorder %s107, %s109
      %p113 = scmp.eq.s32.totalorder %s26, 0
      %p114 = por %p112, %p113
      %p115 = scmp.ne.s32.totalorder %s107, %s109
      %p116 = scmp.eq.s32.totalorder %s31, 1
      %p117 = por %p115, %p116
      %p118 = scmp.ne.s32.totalorder %s109, %s110
      %p119 = scmp.eq.s32.totalorder %s31, 0
      %p120 = por %p118, %p119
      %p121 = scmp.ne.s32.totalorder %s109, %s110
      %p122 = scmp.eq.s32.totalorder %s32, 1
      %p123 = por %p121, %p122
      %p125 = scmp.ne.s32.totalorder %s110, %s124
      %p126 = scmp.eq.s32.totalorder %s32, 0
      %p127 = por %p125, %p126
      %s129 = sadd.s32 %s128, 1
      %p132 = scmp.eq.s32.totalorder %s26, 1
      %p133 = scmp.ne.s32.totalorder %s128, %s130
      %p134 = scmp.eq.s32.totalorder %s26, 0
      %p135 = por %p133, %p134
      %p136 = scmp.ne.s32.totalorder %s128, %s130
      %p137 = scmp.eq.s32.totalorder %s31, 1
      %p138 = por %p136, %p137
      %p139 = scmp.ne.s32.totalorder %s130, %s131
      %p140 = scmp.eq.s32.totalorder %s31, 0
      %p141 = por %p139, %p140
      %p142 = scmp.ne.s32.totalorder %s130, %s131
      %p143 = scmp.eq.s32.totalorder %s32, 1
      %p144 = por %p142, %p143
      %p146 = scmp.ne.s32.totalorder %s131, %s145
      %p147 = scmp.eq.s32.totalorder %s32, 0
      %p148 = por %p146, %p147
      %s150 = sadd.s32 %s149, 1
      %p153 = scmp.eq.s32.totalorder %s26, 1
      %p154 = scmp.ne.s32.totalorder %s149, %s151
      %p155 = scmp.eq.s32.totalorder %s26, 0
      %p156 = por %p154, %p155
      %p157 = scmp.ne.s32.totalorder %s149, %s151
      %p158 = scmp.eq.s32.totalorder %s31, 1
      %p159 = por %p157, %p158
      %p160 = scmp.ne.s32.totalorder %s151, %s152
      %p161 = scmp.eq.s32.totalorder %s31, 0
      %p162 = por %p160, %p161
      %p163 = scmp.ne.s32.totalorder %s151, %s152
      %p164 = scmp.eq.s32.totalorder %s32, 1
      %p165 = por %p163, %p164
      %p167 = scmp.ne.s32.totalorder %s152, %s166
      %p168 = scmp.eq.s32.totalorder %s32, 0
      %p169 = por %p167, %p168
      %s171 = sadd.s32 %s170, 1
      %p174 = scmp.eq.s32.totalorder %s26, 1
      %p175 = scmp.ne.s32.totalorder %s170, %s172
      %p176 = scmp.eq.s32.totalorder %s26, 0
      %p177 = por %p175, %p176
      %p178 = scmp.ne.s32.totalorder %s170, %s172
      %p179 = scmp.eq.s32.totalorder %s31, 1
      %p180 = por %p178, %p179
      %p181 = scmp.ne.s32.totalorder %s172, %s173
      %p182 = scmp.eq.s32.totalorder %s31, 0
      %p183 = por %p181, %p182
      %p184 = scmp.ne.s32.totalorder %s172, %s173
      %p185 = scmp.eq.s32.totalorder %s32, 1
      %p186 = por %p184, %p185
      %p188 = scmp.ne.s32.totalorder %s173, %s187
      %p189 = scmp.eq.s32.totalorder %s32, 0
      %p190 = por %p188, %p189
      %s192 = sadd.s32 %s191, 1
      %p195 = scmp.eq.s32.totalorder %s26, 1
      %p196 = scmp.ne.s32.totalorder %s191, %s193
      %p197 = scmp.eq.s32.totalorder %s26, 0
      %p198 = por %p196, %p197
      %p199 = scmp.ne.s32.totalorder %s191, %s193
      %p200 = scmp.eq.s32.totalorder %s31, 1
      %p201 = por %p199, %p200
      %p202 = scmp.ne.s32.totalorder %s193, %s194
      %p203 = scmp.eq.s32.totalorder %s31, 0
      %p204 = por %p202, %p203
      %p205 = scmp.ne.s32.totalorder %s193, %s194
      %p206 = scmp.eq.s32.totalorder %s32, 1
      %p207 = por %p205, %p206
      %p209 = scmp.ne.s32.totalorder %s194, %s208
      %p210 = scmp.eq.s32.totalorder %s32, 0
      %p211 = por %p209, %p210
      %s213 = sadd.s32 %s212, 1
      %p216 = scmp.eq.s32.totalorder %s26, 1
      %p217 = scmp.ne.s32.totalorder %s212, %s214
      %p218 = scmp.eq.s32.totalorder %s26, 0
      %p219 = por %p217, %p218
      %p220 = scmp.ne.s32.totalorder %s212, %s214
      %p221 = scmp.eq.s32.totalorder %s31, 1
      %p222 = por %p220, %p221
      %p223 = scmp.ne.s32.totalorder %s214, %s215
      %p224 = scmp.eq.s32.totalorder %s31, 0
      %p225 = por %p223, %p224
      %p226 = scmp.ne.s32.totalorder %s214, %s215
      %p227 = scmp.eq.s32.totalorder %s32, 1
      %p228 = por %p226, %p227
      %p230 = scmp.ne.s32.totalorder %s215, %s229
      %p231 = scmp.eq.s32.totalorder %s32, 0
      %p232 = por %p230, %p231
      %s234 = sadd.s32 %s233, 1
      %p237 = scmp.eq.s32.totalorder %s26, 1
      %p238 = scmp.ne.s32.totalorder %s233, %s235
      %p239 = scmp.eq.s32.totalorder %s26, 0
      %p240 = por %p238, %p239
      %p241 = scmp.ne.s32.totalorder %s233, %s235
      %p242 = scmp.eq.s32.totalorder %s31, 1
      %p243 = por %p241, %p242
      %p244 = scmp.ne.s32.totalorder %s235, %s236
      %p245 = scmp.eq.s32.totalorder %s31, 0
      %p246 = por %p244, %p245
      %p247 = scmp.ne.s32.totalorder %s235, %s236
      %p248 = scmp.eq.s32.totalorder %s32, 1
      %p249 = por %p247, %p248
      %p251 = scmp.ne.s32.totalorder %s236, %s250
      %p252 = scmp.eq.s32.totalorder %s32, 0
      %p253 = por %p251, %p252
      %s255 = sadd.s32 %s254, 1
      %p258 = scmp.eq.s32.totalorder %s26, 1
      %p259 = scmp.ne.s32.totalorder %s254, %s256
      %p260 = scmp.eq.s32.totalorder %s26, 0
      %p261 = por %p259, %p260
      %p262 = scmp.ne.s32.totalorder %s254, %s256
      %p263 = scmp.eq.s32.totalorder %s31, 1
      %p264 = por %p262, %p263
      %p265 = scmp.ne.s32.totalorder %s256, %s257
      %p266 = scmp.eq.s32.totalorder %s31, 0
      %p267 = por %p265, %p266
      %p268 = scmp.ne.s32.totalorder %s256, %s257
      %p269 = scmp.eq.s32.totalorder %s32, 1
      %p270 = por %p268, %p269
      %p272 = scmp.ne.s32.totalorder %s257, %s271
      %p273 = scmp.eq.s32.totalorder %s32, 0
      %p274 = por %p272, %p273
      %s275 = ssub.s32 %s26, %s33
      %p276 = scmp.eq.s32.totalorder %s275, 0
      %s278 = sadd.s32 %s277, 1
      %s279 = scalar_select %p276, %s277, %s278
      %p282 = pneg %p276
      %p283 = scmp.eq.s32.totalorder %s26, 1
      %p284 = por %p282, %p283
      %p285 = scmp.ne.s32.totalorder %s277, %s280
      %p286 = scmp.eq.s32.totalorder %s26, 0
      %p287 = por %p285, %p286
      %p288 = scmp.ne.s32.totalorder %s277, %s280
      %p289 = scmp.eq.s32.totalorder %s31, 1
      %p290 = por %p288, %p289
      %p291 = scmp.ne.s32.totalorder %s280, %s281
      %p292 = scmp.eq.s32.totalorder %s31, 0
      %p293 = por %p291, %p292
      %p294 = scmp.ne.s32.totalorder %s280, %s281
      %p295 = scmp.eq.s32.totalorder %s32, 1
      %p296 = por %p294, %p295
      %p298 = scmp.ne.s32.totalorder %s281, %s297
      %p299 = scmp.eq.s32.totalorder %s32, 0
      %p300 = por %p298, %p299
      %s301 = ssub.s32 %s26, %s33
      %p302 = scmp.eq.s32.totalorder %s301, 0
      %s304 = sadd.s32 %s303, 1
      %s305 = scalar_select %p302, %s303, %s304
      %p308 = pneg %p302
      %p309 = scmp.eq.s32.totalorder %s26, 1
      %p310 = por %p308, %p309
      %p311 = scmp.ne.s32.totalorder %s303, %s306
      %p312 = scmp.eq.s32.totalorder %s26, 0
      %p313 = por %p311, %p312
      %p314 = scmp.ne.s32.totalorder %s303, %s306
      %p315 = scmp.eq.s32.totalorder %s31, 1
      %p316 = por %p314, %p315
      %p317 = scmp.ne.s32.totalorder %s306, %s307
      %p318 = scmp.eq.s32.totalorder %s31, 0
      %p319 = por %p317, %p318
      %p320 = scmp.ne.s32.totalorder %s306, %s307
      %p321 = scmp.eq.s32.totalorder %s32, 1
      %p322 = por %p320, %p321
      %p324 = scmp.ne.s32.totalorder %s307, %s323
      %p325 = scmp.eq.s32.totalorder %s32, 0
      %p326 = por %p324, %p325
      %p327 = scmp.le.s32.totalorder 1, %s26
      %p328 = scmp.lt.s32.totalorder %s26, 3
      %p329 = pnand %p327, %p328
      %p330 = pneg %p329
      // Predicated region
      $region9: #{tpu_custom_call.1} parent=5 // pred_check
        _
      $region10: #{tpu_custom_call.1} parent=5 // pred_check_branch
        %332 = sbr.rel (%p329) target = $region12
      $region11: #{tpu_custom_call.1} parent=5 // pred_region
        %s333 = ssub.s32 %s26, 1
        // Predicated region
        $region13: #{tpu_custom_call.1} parent=11 // pred_check
          %p334 = pneg %p47
        $region14: #{tpu_custom_call.1} parent=11 // pred_check_branch
          %336 = sbr.rel (%p334) target = $region16
        $region15: #{tpu_custom_call.1} parent=11 // pred_region
          _
        $region16: #{tpu_custom_call.1} parent=11 // pred_fallthru
          _
        // Predicated region
        $region17: #{tpu_custom_call.1} parent=11 // pred_check
          %p337 = pneg %p120
        $region18: #{tpu_custom_call.1} parent=11 // pred_check_branch
          %339 = sbr.rel (%p337) target = $region20
        $region19: #{tpu_custom_call.1} parent=11 // pred_region
          _
        $region20: #{tpu_custom_call.1} parent=11 // pred_fallthru
          _
        // Predicated region
        $region21: #{tpu_custom_call.1} parent=11 // pred_check
          %p340 = pneg %p141
        $region22: #{tpu_custom_call.1} parent=11 // pred_check_branch
          %342 = sbr.rel (%p340) target = $region24
        $region23: #{tpu_custom_call.1} parent=11 // pred_region
          _
        $region24: #{tpu_custom_call.1} parent=11 // pred_fallthru
          _
        // Predicated region
        $region25: #{tpu_custom_call.1} parent=11 // pred_check
          %p343 = pneg %p162
        $region26: #{tpu_custom_call.1} parent=11 // pred_check_branch
          %345 = sbr.rel (%p343) target = $region28
        $region27: #{tpu_custom_call.1} parent=11 // pred_region
          _
        $region28: #{tpu_custom_call.1} parent=11 // pred_fallthru
          _
        // Predicated region
        $region29: #{tpu_custom_call.1} parent=11 // pred_check
          %p346 = pneg %p183
        $region30: #{tpu_custom_call.1} parent=11 // pred_check_branch
          %348 = sbr.rel (%p346) target = $region32
        $region31: #{tpu_custom_call.1} parent=11 // pred_region
          _
        $region32: #{tpu_custom_call.1} parent=11 // pred_fallthru
          _
        // Predicated region
        $region33: #{tpu_custom_call.1} parent=11 // pred_check
          %p349 = pneg %p204
        $region34: #{tpu_custom_call.1} parent=11 // pred_check_branch
          %351 = sbr.rel (%p349) target = $region36
        $region35: #{tpu_custom_call.1} parent=11 // pred_region
          _
        $region36: #{tpu_custom_call.1} parent=11 // pred_fallthru
          _
        // Predicated region
        $region37: #{tpu_custom_call.1} parent=11 // pred_check
          %p352 = pneg %p225
        $region38: #{tpu_custom_call.1} parent=11 // pred_check_branch
          %354 = sbr.rel (%p352) target = $region40
        $region39: #{tpu_custom_call.1} parent=11 // pred_region
          _
        $region40: #{tpu_custom_call.1} parent=11 // pred_fallthru
          _
        // Predicated region
        $region41: #{tpu_custom_call.1} parent=11 // pred_check
          %p355 = pneg %p246
        $region42: #{tpu_custom_call.1} parent=11 // pred_check_branch
          %357 = sbr.rel (%p355) target = $region44
        $region43: #{tpu_custom_call.1} parent=11 // pred_region
          _
        $region44: #{tpu_custom_call.1} parent=11 // pred_fallthru
          _
        // Predicated region
        $region45: #{tpu_custom_call.1} parent=11 // pred_check
          %p358 = pneg %p267
        $region46: #{tpu_custom_call.1} parent=11 // pred_check_branch
          %360 = sbr.rel (%p358) target = $region48
        $region47: #{tpu_custom_call.1} parent=11 // pred_region
          _
        $region48: #{tpu_custom_call.1} parent=11 // pred_fallthru
          _
      $region12: #{tpu_custom_call.1} parent=5 // pred_fallthru
        _
      %p361 = scmp.lt.s32.totalorder %s26, 2
      // Predicated region
      $region49: #{tpu_custom_call.1} parent=5 // pred_check
        %p362 = pneg %p361
      $region50: #{tpu_custom_call.1} parent=5 // pred_check_branch
        %364 = sbr.rel (%p362) target = $region52
      $region51: #{tpu_custom_call.1} parent=5 // pred_region
        // Predicated region
        $region53: #{tpu_custom_call.1} parent=51 // pred_check
          %p365 = pneg %p67
        $region54: #{tpu_custom_call.1} parent=51 // pred_check_branch
          %367 = sbr.rel (%p365) target = $region56
        $region55: #{tpu_custom_call.1} parent=51 // pred_region
          %p368 = scmp.lt.s32.totalorder %s26, 1
          %s369 = scalar_select %p368, %s26, 1
          %s370 = smul.addr %s369, 2
          %s371 = smul.addr %s370, 4
          %s372 = scalar_lea.vmem %s1, %s371
        $region56: #{tpu_custom_call.1} parent=51 // pred_fallthru
          _
        // Predicated region
        $region57: #{tpu_custom_call.1} parent=51 // pred_check
          %p373 = pneg %p93
        $region58: #{tpu_custom_call.1} parent=51 // pred_check_branch
          %375 = sbr.rel (%p373) target = $region60
        $region59: #{tpu_custom_call.1} parent=51 // pred_region
          %p376 = scmp.lt.s32.totalorder %s26, 1
          %s377 = scalar_select %p376, %s26, 1
          %s378 = scalar_lea.vmem %s2, %s377
        $region60: #{tpu_custom_call.1} parent=51 // pred_fallthru
          _
      $region52: #{tpu_custom_call.1} parent=5 // pred_fallthru
        _
      %p379 = scmp.le.s32.totalorder 1, %s26
      %p380 = scmp.lt.s32.totalorder %s26, 3
      %p381 = pnand %p379, %p380
      %p382 = pneg %p381
      // Predicated region
      $region61: #{tpu_custom_call.1} parent=5 // pred_check
        _
      $region62: #{tpu_custom_call.1} parent=5 // pred_check_branch
        %384 = sbr.rel (%p381) target = $region64
      $region63: #{tpu_custom_call.1} parent=5 // pred_region
        %s385 = ssub.s32 %s26, 1
        %p386 = pneg %p47
        %p387 = pneg %p44
        %p388 = scmp.lt.s32.totalorder %s31, 1
        %s389 = scalar_select %p388, %s31, 1
        %s390 = smul.addr %s389, 2
        %s391 = smul.addr %s390, 4
        %s392 = scalar_lea.vmem %s1, %s391
        %p393 = pneg %p73
        %p394 = pneg %p70
        %p395 = scmp.lt.s32.totalorder %s31, 1
        %s396 = scalar_select %p395, %s31, 1
        %s397 = scalar_lea.vmem %s2, %s396
        %p398 = pneg %p99
        %p399 = pneg %p96
        %p400 = pneg %p120
        %p401 = pneg %p117
        %p402 = pneg %p141
        %p403 = pneg %p138
        %p404 = pneg %p162
        %p405 = pneg %p159
        %p406 = pneg %p183
        %p407 = pneg %p180
        %p408 = pneg %p204
        %p409 = pneg %p201
        %p410 = pneg %p225
        %p411 = pneg %p222
        %p412 = pneg %p246
        %p413 = pneg %p243
        %p414 = pneg %p267
        %p415 = pneg %p264
        %p416 = pneg %p293
        %p417 = pneg %p290
        %s418 = sand.u32 %s280, 1
        %s419 = scalar_lea.sflag [#allocation4], %s418
        %s420 = sand.u32 %s280, 1
        %s421 = scalar_lea.vmem [#allocation3], %s420
        %p422 = pneg %p319
        %p423 = pneg %p316
        %s424 = sand.u32 %s306, 1
        %s425 = scalar_lea.sflag [#allocation6], %s424
        %s426 = sand.u32 %s306, 1
        %s427 = smul.addr %s426, 8
        %s428 = scalar_lea.vmem [#allocation5], %s427
        %p429 = scmp.lt.s32.totalorder %s31, 1
        %s430 = scalar_select %p429, %s31, 1
        %s431 = smul.addr %s430, 2
        %s432 = smul.addr %s431, 4
        %s433 = scalar_lea.vmem %s1, %s432
        %p434 = scmp.lt.s32.totalorder %s31, 1
        %s435 = scalar_select %p434, %s31, 1
        %s436 = scalar_lea.vmem %s2, %s435
        %v438 = vld [vmem:[%s433] sm:$0xf]
        %v439 = vld [vmem:[%s433 + $0x4] sm:$0xf]
        %s440 = sld [smem:[#allocation2]]
        %v441 = vld [vmem:[%s3] sm:$0xff]
        %v442 = vld [vmem:[%s3 + $0x8] sm:$0xff]
        %v443 = vld [vmem:[%s3 + $0x10] sm:$0xff]
        %v444 = vld [vmem:[%s3 + $0x18] sm:$0xff]
        %v445 = vld [vmem:[%s3 + $0x20] sm:$0xff]
        %v446 = vld [vmem:[%s3 + $0x28] sm:$0xff]
        %v447 = vld [vmem:[%s3 + $0x30] sm:$0xff]
        %v448 = vld [vmem:[%s3 + $0x38] sm:$0xff]
        %v449 = vld [vmem:[%s4] sm:$0xf]
        %v451 = vlaneseq
        %v452 = vshrl.u32 %v451, 7
        %v453 = vsub.s32 0, %v452
        %v454 = vrot.slane %v449, %v453
        %v455 = vlaneseq
        %v456 = vshrl.u32 %v455, 7
        %v457 = vsub.s32 1, %v456
        %v458 = vrot.slane %v449, %v457
        %v459 = vlaneseq
        %v460 = vshrl.u32 %v459, 7
        %v461 = vsub.s32 2, %v460
        %v462 = vrot.slane %v449, %v461
        %v463 = vlaneseq
        %v464 = vshrl.u32 %v463, 7
        %v465 = vsub.s32 3, %v464
        %v466 = vrot.slane %v449, %v465
        %v473 = vunpack.c.l.b16 %v438
        %v474 = vunpack.c.l.b16 %v439
        %v475 = vpack.c.b16 %v474, %v473
        %v484 = vunpack.c.l.b16 %v441
        %v485 = vunpack.c.h.b16 %v441
        %v486 = vunpack.c.l.b16 %v442
        %v487 = vunpack.c.h.b16 %v442
        %v488 = vunpack.c.l.b16 %v443
        %v489 = vunpack.c.h.b16 %v443
        %v490 = vunpack.c.l.b16 %v444
        %v491 = vunpack.c.h.b16 %v444
        %v492 = vunpack.c.l.b16 %v445
        %v493 = vunpack.c.h.b16 %v445
        %v494 = vunpack.c.l.b16 %v446
        %v495 = vunpack.c.h.b16 %v446
        %v496 = vunpack.c.l.b16 %v447
        %v497 = vunpack.c.h.b16 %v447
        %v498 = vunpack.c.l.b16 %v448
        %v499 = vunpack.c.h.b16 %v448
        %v500 = vpack.c.b16 %v488, %v484
        %v501 = vpack.c.b16 %v489, %v485
        %v502 = vpack.c.b16 %v490, %v486
        %v503 = vpack.c.b16 %v491, %v487
        %v504 = vpack.c.b16 %v496, %v492
        %v505 = vpack.c.b16 %v497, %v493
        %v506 = vpack.c.b16 %v498, %v494
        %v507 = vpack.c.b16 %v499, %v495
        %vm516 = vcmask 261120
        %v518 = vsel %vm516, %v475, 0
        %520 = vmatprep.subr.bf16.mxu0 %v501
        %521 = vmatpush1.bf16.msra.mxu0 %v500
        %522 = vmatprep.subr.bf16.mxu0 %v505
        %523 = vmatpush1.bf16.msra.mxu0 %v504
        %524 = vmatprep.subr.bf16.mxu0 0
        %525 = vmatpush1.bf16.msra.mxu0 0
        %526 = vmatprep.subr.bf16.mxu0 0
        %527 = vmatpush1.bf16.msra.mxu0 0
        %528 = vmatprep.subr.bf16.mxu0 0
        %529 = vmatpush1.bf16.msra.mxu0 0
        %530 = vmatprep.subr.bf16.mxu0 0
        %531 = vmatpush1.bf16.msra.mxu0 0
        %532 = vmatprep.subr.bf16.mxu0 0
        %533 = vmatpush1.bf16.msra.mxu0 0
        %534 = vmatprep.subr.bf16.mxu0 0
        %535 = vmatpush1.bf16.msra.mxu0 0
        %536 = vmatprep.subr.bf16.mxu0 0
        %537 = vmatpush1.bf16.msra.mxu0 0
        %538 = vmatprep.subr.bf16.mxu0 0
        %539 = vmatpush1.bf16.msra.mxu0 0
        %540 = vmatprep.subr.bf16.mxu0 0
        %541 = vmatpush1.bf16.msra.mxu0 0
        %542 = vmatprep.subr.bf16.mxu0 0
        %543 = vmatpush1.bf16.msra.mxu0 0
        %544 = vmatprep.subr.bf16.mxu0 0
        %545 = vmatpush1.bf16.msra.mxu0 0
        %546 = vmatprep.subr.bf16.mxu0 0
        %547 = vmatpush1.bf16.msra.mxu0 0
        %548 = vmatprep.subr.bf16.mxu0 0
        %549 = vmatpush1.bf16.msra.mxu0 0
        %550 = vmatprep.subr.bf16.mxu0 0
        %551 = vmatpush1.bf16.msra.mxu0 0
        %552 = vmatprep.mubr.bf16.mxu0 0
        %553 = vmatmul.mubr.bf16.gmra.mrb[0].mxu0 %v518
        %v554 = vpop.f32.mrb[0].mxu0
        %v555 = vadd.f32 %v454, %v554
        %v556 = vpop.f32.mrb[0].mxu0
        %v557 = vadd.f32 %v458, %v556
        %v558 = vpop.f32.mrb[0].mxu0
        %v559 = vadd.f32 %v454, %v558
        %v560 = vpop.f32.mrb[0].mxu0
        %v561 = vadd.f32 %v458, %v560
        %562 = vdwg.mxu0
        %563 = vmatprep.subr.bf16.mxu0 %v503
        %564 = vmatpush1.bf16.msra.mxu0 %v502
        %565 = vmatprep.subr.bf16.mxu0 %v507
        %566 = vmatpush1.bf16.msra.mxu0 %v506
        %567 = vmatprep.subr.bf16.mxu0 0
        %568 = vmatpush1.bf16.msra.mxu0 0
        %569 = vmatprep.subr.bf16.mxu0 0
        %570 = vmatpush1.bf16.msra.mxu0 0
        %571 = vmatprep.subr.bf16.mxu0 0
        %572 = vmatpush1.bf16.msra.mxu0 0
        %573 = vmatprep.subr.bf16.mxu0 0
        %574 = vmatpush1.bf16.msra.mxu0 0
        %575 = vmatprep.subr.bf16.mxu0 0
        %576 = vmatpush1.bf16.msra.mxu0 0
        %577 = vmatprep.subr.bf16.mxu0 0
        %578 = vmatpush1.bf16.msra.mxu0 0
        %579 = vmatprep.subr.bf16.mxu0 0
        %580 = vmatpush1.bf16.msra.mxu0 0
        %581 = vmatprep.subr.bf16.mxu0 0
        %582 = vmatpush1.bf16.msra.mxu0 0
        %583 = vmatprep.subr.bf16.mxu0 0
        %584 = vmatpush1.bf16.msra.mxu0 0
        %585 = vmatprep.subr.bf16.mxu0 0
        %586 = vmatpush1.bf16.msra.mxu0 0
        %587 = vmatprep.subr.bf16.mxu0 0
        %588 = vmatpush1.bf16.msra.mxu0 0
        %589 = vmatprep.subr.bf16.mxu0 0
        %590 = vmatpush1.bf16.msra.mxu0 0
        %591 = vmatprep.subr.bf16.mxu0 0
        %592 = vmatpush1.bf16.msra.mxu0 0
        %593 = vmatprep.subr.bf16.mxu0 0
        %594 = vmatpush1.bf16.msra.mxu0 0
        %595 = vmatprep.mubr.bf16.mxu0 0
        %596 = vmatmul.mubr.bf16.gmra.mrb[0].mxu0 %v518
        %v597 = vpop.f32.mrb[0].mxu0
        %v598 = vadd.f32 %v462, %v597
        %v599 = vpop.f32.mrb[0].mxu0
        %v600 = vadd.f32 %v466, %v599
        %v601 = vpop.f32.mrb[0].mxu0
        %v602 = vadd.f32 %v462, %v601
        %v603 = vpop.f32.mrb[0].mxu0
        %v604 = vadd.f32 %v466, %v603
        %605 = vdwg.mxu0
        %v606 = vmax.f32 %v555, 0.0
        %v607 = vmax.f32 %v557, 0.0
        %v608 = vmax.f32 %v598, 0.0
        %v609 = vmax.f32 %v600, 0.0
        %v610 = vmax.f32 %v559, 0.0
        %v611 = vmax.f32 %v561, 0.0
        %v612 = vmax.f32 %v602, 0.0
        %v613 = vmax.f32 %v604, 0.0
        %v614 = vpack.c.bf16 %v610, %v606
        %v615 = vpack.c.bf16 %v611, %v607
        %v616 = vpack.c.bf16 %v612, %v608
        %v617 = vpack.c.bf16 %v613, %v609
        %v618 = vld [vmem:[%s5] sm:$0xf]
        %v619 = vld [vmem:[%s5 + $0x4] sm:$0xf]
        %v620 = vld [vmem:[%s5 + $0x8] sm:$0xf]
        %v621 = vld [vmem:[%s5 + $0xc] sm:$0xf]
        %v622 = vld [vmem:[%s5 + $0x10] sm:$0xf]
        %v623 = vld [vmem:[%s5 + $0x14] sm:$0xf]
        %v624 = vld [vmem:[%s5 + $0x18] sm:$0xf]
        %v625 = vld [vmem:[%s5 + $0x1c] sm:$0xf]
        %v626 = vld [vmem:[%s5 + $0x20] sm:$0xf]
        %v627 = vld [vmem:[%s5 + $0x24] sm:$0xf]
        %v628 = vld [vmem:[%s5 + $0x28] sm:$0xf]
        %v629 = vld [vmem:[%s5 + $0x2c] sm:$0xf]
        %v630 = vld [vmem:[%s5 + $0x30] sm:$0xf]
        %v631 = vld [vmem:[%s5 + $0x34] sm:$0xf]
        %v632 = vld [vmem:[%s5 + $0x38] sm:$0xf]
        %v633 = vld [vmem:[%s5 + $0x3c] sm:$0xf]
        %v634 = vld [vmem:[%s5 + $0x40] sm:$0xf]
        %v635 = vld [vmem:[%s5 + $0x44] sm:$0xf]
        %v636 = vld [vmem:[%s5 + $0x48] sm:$0xf]
        %v637 = vld [vmem:[%s5 + $0x4c] sm:$0xf]
        %v638 = vld [vmem:[%s5 + $0x50] sm:$0xf]
        %v639 = vld [vmem:[%s5 + $0x54] sm:$0xf]
        %v640 = vld [vmem:[%s5 + $0x58] sm:$0xf]
        %v641 = vld [vmem:[%s5 + $0x5c] sm:$0xf]
        %v642 = vld [vmem:[%s5 + $0x60] sm:$0xf]
        %v643 = vld [vmem:[%s5 + $0x64] sm:$0xf]
        %v644 = vld [vmem:[%s5 + $0x68] sm:$0xf]
        %v645 = vld [vmem:[%s5 + $0x6c] sm:$0xf]
        %v646 = vld [vmem:[%s5 + $0x70] sm:$0xf]
        %v647 = vld [vmem:[%s5 + $0x74] sm:$0xf]
        %v648 = vld [vmem:[%s5 + $0x78] sm:$0xf]
        %v649 = vld [vmem:[%s5 + $0x7c] sm:$0xf]
        %v650 = vld [vmem:[%s5 + $0x80] sm:$0xf]
        %v651 = vld [vmem:[%s5 + $0x84] sm:$0xf]
        %v652 = vld [vmem:[%s5 + $0x88] sm:$0xf]
        %v653 = vld [vmem:[%s5 + $0x8c] sm:$0xf]
        %v654 = vld [vmem:[%s5 + $0x90] sm:$0xf]
        %v655 = vld [vmem:[%s5 + $0x94] sm:$0xf]
        %v656 = vld [vmem:[%s5 + $0x98] sm:$0xf]
        %v657 = vld [vmem:[%s5 + $0x9c] sm:$0xf]
        %v658 = vld [vmem:[%s5 + $0xa0] sm:$0xf]
        %v659 = vld [vmem:[%s5 + $0xa4] sm:$0xf]
        %v660 = vld [vmem:[%s5 + $0xa8] sm:$0xf]
        %v661 = vld [vmem:[%s5 + $0xac] sm:$0xf]
        %v662 = vld [vmem:[%s5 + $0xb0] sm:$0xf]
        %v663 = vld [vmem:[%s5 + $0xb4] sm:$0xf]
        %v664 = vld [vmem:[%s5 + $0xb8] sm:$0xf]
        %v665 = vld [vmem:[%s5 + $0xbc] sm:$0xf]
        %v666 = vld [vmem:[%s5 + $0xc0] sm:$0xf]
        %v667 = vld [vmem:[%s5 + $0xc4] sm:$0xf]
        %v668 = vld [vmem:[%s5 + $0xc8] sm:$0xf]
        %v669 = vld [vmem:[%s5 + $0xcc] sm:$0xf]
        %v670 = vld [vmem:[%s5 + $0xd0] sm:$0xf]
        %v671 = vld [vmem:[%s5 + $0xd4] sm:$0xf]
        %v672 = vld [vmem:[%s5 + $0xd8] sm:$0xf]
        %v673 = vld [vmem:[%s5 + $0xdc] sm:$0xf]
        %v674 = vld [vmem:[%s5 + $0xe0] sm:$0xf]
        %v675 = vld [vmem:[%s5 + $0xe4] sm:$0xf]
        %v676 = vld [vmem:[%s5 + $0xe8] sm:$0xf]
        %v677 = vld [vmem:[%s5 + $0xec] sm:$0xf]
        %v678 = vld [vmem:[%s5 + $0xf0] sm:$0xf]
        %v679 = vld [vmem:[%s5 + $0xf4] sm:$0xf]
        %v680 = vld [vmem:[%s5 + $0xf8] sm:$0xf]
        %v681 = vld [vmem:[%s5 + $0xfc] sm:$0xf]
        %v682 = vld [vmem:[%s6] sm:$0x1]
        %v684 = vlaneseq
        %v685 = vshrl.u32 %v684, 7
        %v686 = vsub.s32 0, %v685
        %v687 = vrot.slane %v682, %v686
        %v753 = vunpack.c.l.b16 %v618
        %v754 = vunpack.c.l.b16 %v619
        %v755 = vunpack.c.l.b16 %v620
        %v756 = vunpack.c.l.b16 %v621
        %v757 = vunpack.c.l.b16 %v622
        %v758 = vunpack.c.l.b16 %v623
        %v759 = vunpack.c.l.b16 %v624
        %v760 = vunpack.c.l.b16 %v625
        %v761 = vunpack.c.l.b16 %v626
        %v762 = vunpack.c.l.b16 %v627
        %v763 = vunpack.c.l.b16 %v628
        %v764 = vunpack.c.l.b16 %v629
        %v765 = vunpack.c.l.b16 %v630
        %v766 = vunpack.c.l.b16 %v631
        %v767 = vunpack.c.l.b16 %v632
        %v768 = vunpack.c.l.b16 %v633
        %v769 = vunpack.c.l.b16 %v634
        %v770 = vunpack.c.l.b16 %v635
        %v771 = vunpack.c.l.b16 %v636
        %v772 = vunpack.c.l.b16 %v637
        %v773 = vunpack.c.l.b16 %v638
        %v774 = vunpack.c.l.b16 %v639
        %v775 = vunpack.c.l.b16 %v640
        %v776 = vunpack.c.l.b16 %v641
        %v777 = vunpack.c.l.b16 %v642
        %v778 = vunpack.c.l.b16 %v643
        %v779 = vunpack.c.l.b16 %v644
        %v780 = vunpack.c.l.b16 %v645
        %v781 = vunpack.c.l.b16 %v646
        %v782 = vunpack.c.l.b16 %v647
        %v783 = vunpack.c.l.b16 %v648
        %v784 = vunpack.c.l.b16 %v649
        %v785 = vunpack.c.l.b16 %v650
        %v786 = vunpack.c.l.b16 %v651
        %v787 = vunpack.c.l.b16 %v652
        %v788 = vunpack.c.l.b16 %v653
        %v789 = vunpack.c.l.b16 %v654
        %v790 = vunpack.c.l.b16 %v655
        %v791 = vunpack.c.l.b16 %v656
        %v792 = vunpack.c.l.b16 %v657
        %v793 = vunpack.c.l.b16 %v658
        %v794 = vunpack.c.l.b16 %v659
        %v795 = vunpack.c.l.b16 %v660
        %v796 = vunpack.c.l.b16 %v661
        %v797 = vunpack.c.l.b16 %v662
        %v798 = vunpack.c.l.b16 %v663
        %v799 = vunpack.c.l.b16 %v664
        %v800 = vunpack.c.l.b16 %v665
        %v801 = vunpack.c.l.b16 %v666
        %v802 = vunpack.c.l.b16 %v667
        %v803 = vunpack.c.l.b16 %v668
        %v804 = vunpack.c.l.b16 %v669
        %v805 = vunpack.c.l.b16 %v670
        %v806 = vunpack.c.l.b16 %v671
        %v807 = vunpack.c.l.b16 %v672
        %v808 = vunpack.c.l.b16 %v673
        %v809 = vunpack.c.l.b16 %v674
        %v810 = vunpack.c.l.b16 %v675
        %v811 = vunpack.c.l.b16 %v676
        %v812 = vunpack.c.l.b16 %v677
        %v813 = vunpack.c.l.b16 %v678
        %v814 = vunpack.c.l.b16 %v679
        %v815 = vunpack.c.l.b16 %v680
        %v816 = vunpack.c.l.b16 %v681
        %v817 = vpack.c.b16 %v754, %v753
        %v818 = vpack.c.b16 %v756, %v755
        %v819 = vpack.c.b16 %v758, %v757
        %v820 = vpack.c.b16 %v760, %v759
        %v821 = vpack.c.b16 %v762, %v761
        %v822 = vpack.c.b16 %v764, %v763
        %v823 = vpack.c.b16 %v766, %v765
        %v824 = vpack.c.b16 %v768, %v767
        %v825 = vpack.c.b16 %v770, %v769
        %v826 = vpack.c.b16 %v772, %v771
        %v827 = vpack.c.b16 %v774, %v773
        %v828 = vpack.c.b16 %v776, %v775
        %v829 = vpack.c.b16 %v778, %v777
        %v830 = vpack.c.b16 %v780, %v779
        %v831 = vpack.c.b16 %v782, %v781
        %v832 = vpack.c.b16 %v784, %v783
        %v833 = vpack.c.b16 %v786, %v785
        %v834 = vpack.c.b16 %v788, %v787
        %v835 = vpack.c.b16 %v790, %v789
        %v836 = vpack.c.b16 %v792, %v791
        %v837 = vpack.c.b16 %v794, %v793
        %v838 = vpack.c.b16 %v796, %v795
        %v839 = vpack.c.b16 %v798, %v797
        %v840 = vpack.c.b16 %v800, %v799
        %v841 = vpack.c.b16 %v802, %v801
        %v842 = vpack.c.b16 %v804, %v803
        %v843 = vpack.c.b16 %v806, %v805
        %v844 = vpack.c.b16 %v808, %v807
        %v845 = vpack.c.b16 %v810, %v809
        %v846 = vpack.c.b16 %v812, %v811
        %v847 = vpack.c.b16 %v814, %v813
        %v848 = vpack.c.b16 %v816, %v815
        %881 = vmatprep.subr.bf16.mxu0 0
        %882 = vmatpush1.bf16.msra.mxu0 %v817
        %883 = vmatprep.subr.bf16.mxu0 0
        %884 = vmatpush1.bf16.msra.mxu0 %v818
        %885 = vmatprep.subr.bf16.mxu0 0
        %886 = vmatpush1.bf16.msra.mxu0 %v819
        %887 = vmatprep.subr.bf16.mxu0 0
        %888 = vmatpush1.bf16.msra.mxu0 %v820
        %889 = vmatprep.subr.bf16.mxu0 0
        %890 = vmatpush1.bf16.msra.mxu0 %v821
        %891 = vmatprep.subr.bf16.mxu0 0
        %892 = vmatpush1.bf16.msra.mxu0 %v822
        %893 = vmatprep.subr.bf16.mxu0 0
        %894 = vmatpush1.bf16.msra.mxu0 %v823
        %895 = vmatprep.subr.bf16.mxu0 0
        %896 = vmatpush1.bf16.msra.mxu0 %v824
        %897 = vmatprep.subr.bf16.mxu0 0
        %898 = vmatpush1.bf16.msra.mxu0 %v825
        %899 = vmatprep.subr.bf16.mxu0 0
        %900 = vmatpush1.bf16.msra.mxu0 %v826
        %901 = vmatprep.subr.bf16.mxu0 0
        %902 = vmatpush1.bf16.msra.mxu0 %v827
        %903 = vmatprep.subr.bf16.mxu0 0
        %904 = vmatpush1.bf16.msra.mxu0 %v828
        %905 = vmatprep.subr.bf16.mxu0 0
        %906 = vmatpush1.bf16.msra.mxu0 %v829
        %907 = vmatprep.subr.bf16.mxu0 0
        %908 = vmatpush1.bf16.msra.mxu0 %v830
        %909 = vmatprep.subr.bf16.mxu0 0
        %910 = vmatpush1.bf16.msra.mxu0 %v831
        %911 = vmatprep.subr.bf16.mxu0 0
        %912 = vmatpush1.bf16.msra.mxu0 %v832
        %913 = vmatprep.mubr.bf16.mxu0 %v615
        %914 = vmatmul.mubr.bf16.gmra.mrb[0].mxu0 %v614
        %v915 = vpop.f32.mrb[0].mxu0
        %v916 = vadd.f32 %v687, %v915
        %v917 = vpop.f32.mrb[0].mxu0
        %v918 = vpop.f32.mrb[0].mxu0
        %v919 = vadd.f32 %v687, %v918
        %v920 = vpop.f32.mrb[0].mxu0
        %921 = vdwg.mxu0
        %922 = vmatprep.subr.bf16.mxu0 0
        %923 = vmatpush1.bf16.msra.mxu0 %v833
        %924 = vmatprep.subr.bf16.mxu0 0
        %925 = vmatpush1.bf16.msra.mxu0 %v834
        %926 = vmatprep.subr.bf16.mxu0 0
        %927 = vmatpush1.bf16.msra.mxu0 %v835
        %928 = vmatprep.subr.bf16.mxu0 0
        %929 = vmatpush1.bf16.msra.mxu0 %v836
        %930 = vmatprep.subr.bf16.mxu0 0
        %931 = vmatpush1.bf16.msra.mxu0 %v837
        %932 = vmatprep.subr.bf16.mxu0 0
        %933 = vmatpush1.bf16.msra.mxu0 %v838
        %934 = vmatprep.subr.bf16.mxu0 0
        %935 = vmatpush1.bf16.msra.mxu0 %v839
        %936 = vmatprep.subr.bf16.mxu0 0
        %937 = vmatpush1.bf16.msra.mxu0 %v840
        %938 = vmatprep.subr.bf16.mxu0 0
        %939 = vmatpush1.bf16.msra.mxu0 %v841
        %940 = vmatprep.subr.bf16.mxu0 0
        %941 = vmatpush1.bf16.msra.mxu0 %v842
        %942 = vmatprep.subr.bf16.mxu0 0
        %943 = vmatpush1.bf16.msra.mxu0 %v843
        %944 = vmatprep.subr.bf16.mxu0 0
        %945 = vmatpush1.bf16.msra.mxu0 %v844
        %946 = vmatprep.subr.bf16.mxu0 0
        %947 = vmatpush1.bf16.msra.mxu0 %v845
        %948 = vmatprep.subr.bf16.mxu0 0
        %949 = vmatpush1.bf16.msra.mxu0 %v846
        %950 = vmatprep.subr.bf16.mxu0 0
        %951 = vmatpush1.bf16.msra.mxu0 %v847
        %952 = vmatprep.subr.bf16.mxu0 0
        %953 = vmatpush1.bf16.msra.mxu0 %v848
        %954 = vmatprep.mubr.bf16.mxu0 %v617
        %955 = vmatmul.mubr.bf16.gmra.mrb[0].mxu0 %v616
        %v956 = vpop.f32.mrb[0].mxu0
        %v957 = vadd.f32 %v916, %v956
        %v958 = vpop.f32.mrb[0].mxu0
        %v959 = vpop.f32.mrb[0].mxu0
        %v960 = vadd.f32 %v919, %v959
        %v961 = vpop.f32.mrb[0].mxu0
        %962 = vdwg.mxu0
        %v963 = vpack.c.bf16 %v960, %v957
        %v964 = vld [vmem:[%s7] sm:$0xff]
        %v965 = vld [vmem:[%s7 + $0x8] sm:$0xff]
        %v966 = vld [vmem:[%s7 + $0x10] sm:$0xff]
        %v967 = vld [vmem:[%s7 + $0x18] sm:$0xff]
        %v968 = vld [vmem:[%s7 + $0x20] sm:$0xff]
        %v969 = vld [vmem:[%s7 + $0x28] sm:$0xff]
        %v970 = vld [vmem:[%s7 + $0x30] sm:$0xff]
        %v971 = vld [vmem:[%s7 + $0x38] sm:$0xff]
        %v972 = vld [vmem:[%s8] sm:$0xf]
        %v974 = vlaneseq
        %v975 = vshrl.u32 %v974, 7
        %v976 = vsub.s32 0, %v975
        %v977 = vrot.slane %v972, %v976
        %v978 = vlaneseq
        %v979 = vshrl.u32 %v978, 7
        %v980 = vsub.s32 1, %v979
        %v981 = vrot.slane %v972, %v980
        %v982 = vlaneseq
        %v983 = vshrl.u32 %v982, 7
        %v984 = vsub.s32 2, %v983
        %v985 = vrot.slane %v972, %v984
        %v986 = vlaneseq
        %v987 = vshrl.u32 %v986, 7
        %v988 = vsub.s32 3, %v987
        %v989 = vrot.slane %v972, %v988
        %v1002 = vunpack.c.l.b16 %v964
        %v1003 = vunpack.c.h.b16 %v964
        %v1004 = vunpack.c.l.b16 %v965
        %v1005 = vunpack.c.h.b16 %v965
        %v1006 = vunpack.c.l.b16 %v966
        %v1007 = vunpack.c.h.b16 %v966
        %v1008 = vunpack.c.l.b16 %v967
        %v1009 = vunpack.c.h.b16 %v967
        %v1010 = vunpack.c.l.b16 %v968
        %v1011 = vunpack.c.h.b16 %v968
        %v1012 = vunpack.c.l.b16 %v969
        %v1013 = vunpack.c.h.b16 %v969
        %v1014 = vunpack.c.l.b16 %v970
        %v1015 = vunpack.c.h.b16 %v970
        %v1016 = vunpack.c.l.b16 %v971
        %v1017 = vunpack.c.h.b16 %v971
        %v1018 = vpack.c.b16 %v1006, %v1002
        %v1019 = vpack.c.b16 %v1007, %v1003
        %v1020 = vpack.c.b16 %v1008, %v1004
        %v1021 = vpack.c.b16 %v1009, %v1005
        %v1022 = vpack.c.b16 %v1014, %v1010
        %v1023 = vpack.c.b16 %v1015, %v1011
        %v1024 = vpack.c.b16 %v1016, %v1012
        %v1025 = vpack.c.b16 %v1017, %v1013
        %1034 = vmatprep.subr.bf16.mxu0 %v1019
        %1035 = vmatpush1.bf16.msra.mxu0 %v1018
        %1036 = vmatprep.subr.bf16.mxu0 %v1023
        %1037 = vmatpush1.bf16.msra.mxu0 %v1022
        %1038 = vmatprep.subr.bf16.mxu0 0
        %1039 = vmatpush1.bf16.msra.mxu0 0
        %1040 = vmatprep.subr.bf16.mxu0 0
        %1041 = vmatpush1.bf16.msra.mxu0 0
        %1042 = vmatprep.subr.bf16.mxu0 0
        %1043 = vmatpush1.bf16.msra.mxu0 0
        %1044 = vmatprep.subr.bf16.mxu0 0
        %1045 = vmatpush1.bf16.msra.mxu0 0
        %1046 = vmatprep.subr.bf16.mxu0 0
        %1047 = vmatpush1.bf16.msra.mxu0 0
        %1048 = vmatprep.subr.bf16.mxu0 0
        %1049 = vmatpush1.bf16.msra.mxu0 0
        %1050 = vmatprep.subr.bf16.mxu0 0
        %1051 = vmatpush1.bf16.msra.mxu0 0
        %1052 = vmatprep.subr.bf16.mxu0 0
        %1053 = vmatpush1.bf16.msra.mxu0 0
        %1054 = vmatprep.subr.bf16.mxu0 0
        %1055 = vmatpush1.bf16.msra.mxu0 0
        %1056 = vmatprep.subr.bf16.mxu0 0
        %1057 = vmatpush1.bf16.msra.mxu0 0
        %1058 = vmatprep.subr.bf16.mxu0 0
        %1059 = vmatpush1.bf16.msra.mxu0 0
        %1060 = vmatprep.subr.bf16.mxu0 0
        %1061 = vmatpush1.bf16.msra.mxu0 0
        %1062 = vmatprep.subr.bf16.mxu0 0
        %1063 = vmatpush1.bf16.msra.mxu0 0
        %1064 = vmatprep.subr.bf16.mxu0 0
        %1065 = vmatpush1.bf16.msra.mxu0 0
        %1066 = vmatprep.mubr.bf16.mxu0 0
        %1067 = vmatmul.mubr.bf16.gmra.mrb[0].mxu0 %v518
        %v1068 = vpop.f32.mrb[0].mxu0
        %v1069 = vadd.f32 %v977, %v1068
        %v1070 = vpop.f32.mrb[0].mxu0
        %v1071 = vadd.f32 %v981, %v1070
        %v1072 = vpop.f32.mrb[0].mxu0
        %v1073 = vadd.f32 %v977, %v1072
        %v1074 = vpop.f32.mrb[0].mxu0
        %v1075 = vadd.f32 %v981, %v1074
        %1076 = vdwg.mxu0
        %1077 = vmatprep.subr.bf16.mxu0 %v1021
        %1078 = vmatpush1.bf16.msra.mxu0 %v1020
        %1079 = vmatprep.subr.bf16.mxu0 %v1025
        %1080 = vmatpush1.bf16.msra.mxu0 %v1024
        %1081 = vmatprep.subr.bf16.mxu0 0
        %1082 = vmatpush1.bf16.msra.mxu0 0
        %1083 = vmatprep.subr.bf16.mxu0 0
        %1084 = vmatpush1.bf16.msra.mxu0 0
        %1085 = vmatprep.subr.bf16.mxu0 0
        %1086 = vmatpush1.bf16.msra.mxu0 0
        %1087 = vmatprep.subr.bf16.mxu0 0
        %1088 = vmatpush1.bf16.msra.mxu0 0
        %1089 = vmatprep.subr.bf16.mxu0 0
        %1090 = vmatpush1.bf16.msra.mxu0 0
        %1091 = vmatprep.subr.bf16.mxu0 0
        %1092 = vmatpush1.bf16.msra.mxu0 0
        %1093 = vmatprep.subr.bf16.mxu0 0
        %1094 = vmatpush1.bf16.msra.mxu0 0
        %1095 = vmatprep.subr.bf16.mxu0 0
        %1096 = vmatpush1.bf16.msra.mxu0 0
        %1097 = vmatprep.subr.bf16.mxu0 0
        %1098 = vmatpush1.bf16.msra.mxu0 0
        %1099 = vmatprep.subr.bf16.mxu0 0
        %1100 = vmatpush1.bf16.msra.mxu0 0
        %1101 = vmatprep.subr.bf16.mxu0 0
        %1102 = vmatpush1.bf16.msra.mxu0 0
        %1103 = vmatprep.subr.bf16.mxu0 0
        %1104 = vmatpush1.bf16.msra.mxu0 0
        %1105 = vmatprep.subr.bf16.mxu0 0
        %1106 = vmatpush1.bf16.msra.mxu0 0
        %1107 = vmatprep.subr.bf16.mxu0 0
        %1108 = vmatpush1.bf16.msra.mxu0 0
        %1109 = vmatprep.mubr.bf16.mxu0 0
        %1110 = vmatmul.mubr.bf16.gmra.mrb[0].mxu0 %v518
        %v1111 = vpop.f32.mrb[0].mxu0
        %v1112 = vadd.f32 %v985, %v1111
        %v1113 = vpop.f32.mrb[0].mxu0
        %v1114 = vadd.f32 %v989, %v1113
        %v1115 = vpop.f32.mrb[0].mxu0
        %v1116 = vadd.f32 %v985, %v1115
        %v1117 = vpop.f32.mrb[0].mxu0
        %v1118 = vadd.f32 %v989, %v1117
        %1119 = vdwg.mxu0
        %v1120 = vmax.f32 %v1069, 0.0
        %v1121 = vmax.f32 %v1071, 0.0
        %v1122 = vmax.f32 %v1112, 0.0
        %v1123 = vmax.f32 %v1114, 0.0
        %v1124 = vmax.f32 %v1073, 0.0
        %v1125 = vmax.f32 %v1075, 0.0
        %v1126 = vmax.f32 %v1116, 0.0
        %v1127 = vmax.f32 %v1118, 0.0
        %v1128 = vpack.c.bf16 %v1124, %v1120
        %v1129 = vpack.c.bf16 %v1125, %v1121
        %v1130 = vpack.c.bf16 %v1126, %v1122
        %v1131 = vpack.c.bf16 %v1127, %v1123
        %v1132 = vld [vmem:[%s9] sm:$0xf]
        %v1133 = vld [vmem:[%s9 + $0x4] sm:$0xf]
        %v1134 = vld [vmem:[%s9 + $0x8] sm:$0xf]
        %v1135 = vld [vmem:[%s9 + $0xc] sm:$0xf]
        %v1136 = vld [vmem:[%s9 + $0x10] sm:$0xf]
        %v1137 = vld [vmem:[%s9 + $0x14] sm:$0xf]
        %v1138 = vld [vmem:[%s9 + $0x18] sm:$0xf]
        %v1139 = vld [vmem:[%s9 + $0x1c] sm:$0xf]
        %v1140 = vld [vmem:[%s9 + $0x20] sm:$0xf]
        %v1141 = vld [vmem:[%s9 + $0x24] sm:$0xf]
        %v1142 = vld [vmem:[%s9 + $0x28] sm:$0xf]
        %v1143 = vld [vmem:[%s9 + $0x2c] sm:$0xf]
        %v1144 = vld [vmem:[%s9 + $0x30] sm:$0xf]
        %v1145 = vld [vmem:[%s9 + $0x34] sm:$0xf]
        %v1146 = vld [vmem:[%s9 + $0x38] sm:$0xf]
        %v1147 = vld [vmem:[%s9 + $0x3c] sm:$0xf]
        %v1148 = vld [vmem:[%s9 + $0x40] sm:$0xf]
        %v1149 = vld [vmem:[%s9 + $0x44] sm:$0xf]
        %v1150 = vld [vmem:[%s9 + $0x48] sm:$0xf]
        %v1151 = vld [vmem:[%s9 + $0x4c] sm:$0xf]
        %v1152 = vld [vmem:[%s9 + $0x50] sm:$0xf]
        %v1153 = vld [vmem:[%s9 + $0x54] sm:$0xf]
        %v1154 = vld [vmem:[%s9 + $0x58] sm:$0xf]
        %v1155 = vld [vmem:[%s9 + $0x5c] sm:$0xf]
        %v1156 = vld [vmem:[%s9 + $0x60] sm:$0xf]
        %v1157 = vld [vmem:[%s9 + $0x64] sm:$0xf]
        %v1158 = vld [vmem:[%s9 + $0x68] sm:$0xf]
        %v1159 = vld [vmem:[%s9 + $0x6c] sm:$0xf]
        %v1160 = vld [vmem:[%s9 + $0x70] sm:$0xf]
        %v1161 = vld [vmem:[%s9 + $0x74] sm:$0xf]
        %v1162 = vld [vmem:[%s9 + $0x78] sm:$0xf]
        %v1163 = vld [vmem:[%s9 + $0x7c] sm:$0xf]
        %v1164 = vld [vmem:[%s9 + $0x80] sm:$0xf]
        %v1165 = vld [vmem:[%s9 + $0x84] sm:$0xf]
        %v1166 = vld [vmem:[%s9 + $0x88] sm:$0xf]
        %v1167 = vld [vmem:[%s9 + $0x8c] sm:$0xf]
        %v1168 = vld [vmem:[%s9 + $0x90] sm:$0xf]
        %v1169 = vld [vmem:[%s9 + $0x94] sm:$0xf]
        %v1170 = vld [vmem:[%s9 + $0x98] sm:$0xf]
        %v1171 = vld [vmem:[%s9 + $0x9c] sm:$0xf]
        %v1172 = vld [vmem:[%s9 + $0xa0] sm:$0xf]
        %v1173 = vld [vmem:[%s9 + $0xa4] sm:$0xf]
        %v1174 = vld [vmem:[%s9 + $0xa8] sm:$0xf]
        %v1175 = vld [vmem:[%s9 + $0xac] sm:$0xf]
        %v1176 = vld [vmem:[%s9 + $0xb0] sm:$0xf]
        %v1177 = vld [vmem:[%s9 + $0xb4] sm:$0xf]
        %v1178 = vld [vmem:[%s9 + $0xb8] sm:$0xf]
        %v1179 = vld [vmem:[%s9 + $0xbc] sm:$0xf]
        %v1180 = vld [vmem:[%s9 + $0xc0] sm:$0xf]
        %v1181 = vld [vmem:[%s9 + $0xc4] sm:$0xf]
        %v1182 = vld [vmem:[%s9 + $0xc8] sm:$0xf]
        %v1183 = vld [vmem:[%s9 + $0xcc] sm:$0xf]
        %v1184 = vld [vmem:[%s9 + $0xd0] sm:$0xf]
        %v1185 = vld [vmem:[%s9 + $0xd4] sm:$0xf]
        %v1186 = vld [vmem:[%s9 + $0xd8] sm:$0xf]
        %v1187 = vld [vmem:[%s9 + $0xdc] sm:$0xf]
        %v1188 = vld [vmem:[%s9 + $0xe0] sm:$0xf]
        %v1189 = vld [vmem:[%s9 + $0xe4] sm:$0xf]
        %v1190 = vld [vmem:[%s9 + $0xe8] sm:$0xf]
        %v1191 = vld [vmem:[%s9 + $0xec] sm:$0xf]
        %v1192 = vld [vmem:[%s9 + $0xf0] sm:$0xf]
        %v1193 = vld [vmem:[%s9 + $0xf4] sm:$0xf]
        %v1194 = vld [vmem:[%s9 + $0xf8] sm:$0xf]
        %v1195 = vld [vmem:[%s9 + $0xfc] sm:$0xf]
        %v1196 = vld [vmem:[%s10] sm:$0x1]
        %v1198 = vlaneseq
        %v1199 = vshrl.u32 %v1198, 7
        %v1200 = vsub.s32 0, %v1199
        %v1201 = vrot.slane %v1196, %v1200
        %v1267 = vunpack.c.l.b16 %v1132
        %v1268 = vunpack.c.l.b16 %v1133
        %v1269 = vunpack.c.l.b16 %v1134
        %v1270 = vunpack.c.l.b16 %v1135
        %v1271 = vunpack.c.l.b16 %v1136
        %v1272 = vunpack.c.l.b16 %v1137
        %v1273 = vunpack.c.l.b16 %v1138
        %v1274 = vunpack.c.l.b16 %v1139
        %v1275 = vunpack.c.l.b16 %v1140
        %v1276 = vunpack.c.l.b16 %v1141
        %v1277 = vunpack.c.l.b16 %v1142
        %v1278 = vunpack.c.l.b16 %v1143
        %v1279 = vunpack.c.l.b16 %v1144
        %v1280 = vunpack.c.l.b16 %v1145
        %v1281 = vunpack.c.l.b16 %v1146
        %v1282 = vunpack.c.l.b16 %v1147
        %v1283 = vunpack.c.l.b16 %v1148
        %v1284 = vunpack.c.l.b16 %v1149
        %v1285 = vunpack.c.l.b16 %v1150
        %v1286 = vunpack.c.l.b16 %v1151
        %v1287 = vunpack.c.l.b16 %v1152
        %v1288 = vunpack.c.l.b16 %v1153
        %v1289 = vunpack.c.l.b16 %v1154
        %v1290 = vunpack.c.l.b16 %v1155
        %v1291 = vunpack.c.l.b16 %v1156
        %v1292 = vunpack.c.l.b16 %v1157
        %v1293 = vunpack.c.l.b16 %v1158
        %v1294 = vunpack.c.l.b16 %v1159
        %v1295 = vunpack.c.l.b16 %v1160
        %v1296 = vunpack.c.l.b16 %v1161
        %v1297 = vunpack.c.l.b16 %v1162
        %v1298 = vunpack.c.l.b16 %v1163
        %v1299 = vunpack.c.l.b16 %v1164
        %v1300 = vunpack.c.l.b16 %v1165
        %v1301 = vunpack.c.l.b16 %v1166
        %v1302 = vunpack.c.l.b16 %v1167
        %v1303 = vunpack.c.l.b16 %v1168
        %v1304 = vunpack.c.l.b16 %v1169
        %v1305 = vunpack.c.l.b16 %v1170
        %v1306 = vunpack.c.l.b16 %v1171
        %v1307 = vunpack.c.l.b16 %v1172
        %v1308 = vunpack.c.l.b16 %v1173
        %v1309 = vunpack.c.l.b16 %v1174
        %v1310 = vunpack.c.l.b16 %v1175
        %v1311 = vunpack.c.l.b16 %v1176
        %v1312 = vunpack.c.l.b16 %v1177
        %v1313 = vunpack.c.l.b16 %v1178
        %v1314 = vunpack.c.l.b16 %v1179
        %v1315 = vunpack.c.l.b16 %v1180
        %v1316 = vunpack.c.l.b16 %v1181
        %v1317 = vunpack.c.l.b16 %v1182
        %v1318 = vunpack.c.l.b16 %v1183
        %v1319 = vunpack.c.l.b16 %v1184
        %v1320 = vunpack.c.l.b16 %v1185
        %v1321 = vunpack.c.l.b16 %v1186
        %v1322 = vunpack.c.l.b16 %v1187
        %v1323 = vunpack.c.l.b16 %v1188
        %v1324 = vunpack.c.l.b16 %v1189
        %v1325 = vunpack.c.l.b16 %v1190
        %v1326 = vunpack.c.l.b16 %v1191
        %v1327 = vunpack.c.l.b16 %v1192
        %v1328 = vunpack.c.l.b16 %v1193
        %v1329 = vunpack.c.l.b16 %v1194
        %v1330 = vunpack.c.l.b16 %v1195
        %v1331 = vpack.c.b16 %v1268, %v1267
        %v1332 = vpack.c.b16 %v1270, %v1269
        %v1333 = vpack.c.b16 %v1272, %v1271
        %v1334 = vpack.c.b16 %v1274, %v1273
        %v1335 = vpack.c.b16 %v1276, %v1275
        %v1336 = vpack.c.b16 %v1278, %v1277
        %v1337 = vpack.c.b16 %v1280, %v1279
        %v1338 = vpack.c.b16 %v1282, %v1281
        %v1339 = vpack.c.b16 %v1284, %v1283
        %v1340 = vpack.c.b16 %v1286, %v1285
        %v1341 = vpack.c.b16 %v1288, %v1287
        %v1342 = vpack.c.b16 %v1290, %v1289
        %v1343 = vpack.c.b16 %v1292, %v1291
        %v1344 = vpack.c.b16 %v1294, %v1293
        %v1345 = vpack.c.b16 %v1296, %v1295
        %v1346 = vpack.c.b16 %v1298, %v1297
        %v1347 = vpack.c.b16 %v1300, %v1299
        %v1348 = vpack.c.b16 %v1302, %v1301
        %v1349 = vpack.c.b16 %v1304, %v1303
        %v1350 = vpack.c.b16 %v1306, %v1305
        %v1351 = vpack.c.b16 %v1308, %v1307
        %v1352 = vpack.c.b16 %v1310, %v1309
        %v1353 = vpack.c.b16 %v1312, %v1311
        %v1354 = vpack.c.b16 %v1314, %v1313
        %v1355 = vpack.c.b16 %v1316, %v1315
        %v1356 = vpack.c.b16 %v1318, %v1317
        %v1357 = vpack.c.b16 %v1320, %v1319
        %v1358 = vpack.c.b16 %v1322, %v1321
        %v1359 = vpack.c.b16 %v1324, %v1323
        %v1360 = vpack.c.b16 %v1326, %v1325
        %v1361 = vpack.c.b16 %v1328, %v1327
        %v1362 = vpack.c.b16 %v1330, %v1329
        %1395 = vmatprep.subr.bf16.mxu0 0
        %1396 = vmatpush1.bf16.msra.mxu0 %v1331
        %1397 = vmatprep.subr.bf16.mxu0 0
        %1398 = vmatpush1.bf16.msra.mxu0 %v1332
        %1399 = vmatprep.subr.bf16.mxu0 0
        %1400 = vmatpush1.bf16.msra.mxu0 %v1333
        %1401 = vmatprep.subr.bf16.mxu0 0
        %1402 = vmatpush1.bf16.msra.mxu0 %v1334
        %1403 = vmatprep.subr.bf16.mxu0 0
        %1404 = vmatpush1.bf16.msra.mxu0 %v1335
        %1405 = vmatprep.subr.bf16.mxu0 0
        %1406 = vmatpush1.bf16.msra.mxu0 %v1336
        %1407 = vmatprep.subr.bf16.mxu0 0
        %1408 = vmatpush1.bf16.msra.mxu0 %v1337
        %1409 = vmatprep.subr.bf16.mxu0 0
        %1410 = vmatpush1.bf16.msra.mxu0 %v1338
        %1411 = vmatprep.subr.bf16.mxu0 0
        %1412 = vmatpush1.bf16.msra.mxu0 %v1339
        %1413 = vmatprep.subr.bf16.mxu0 0
        %1414 = vmatpush1.bf16.msra.mxu0 %v1340
        %1415 = vmatprep.subr.bf16.mxu0 0
        %1416 = vmatpush1.bf16.msra.mxu0 %v1341
        %1417 = vmatprep.subr.bf16.mxu0 0
        %1418 = vmatpush1.bf16.msra.mxu0 %v1342
        %1419 = vmatprep.subr.bf16.mxu0 0
        %1420 = vmatpush1.bf16.msra.mxu0 %v1343
        %1421 = vmatprep.subr.bf16.mxu0 0
        %1422 = vmatpush1.bf16.msra.mxu0 %v1344
        %1423 = vmatprep.subr.bf16.mxu0 0
        %1424 = vmatpush1.bf16.msra.mxu0 %v1345
        %1425 = vmatprep.subr.bf16.mxu0 0
        %1426 = vmatpush1.bf16.msra.mxu0 %v1346
        %1427 = vmatprep.mubr.bf16.mxu0 %v1129
        %1428 = vmatmul.mubr.bf16.gmra.mrb[0].mxu0 %v1128
        %v1429 = vpop.f32.mrb[0].mxu0
        %v1430 = vadd.f32 %v1201, %v1429
        %v1431 = vpop.f32.mrb[0].mxu0
        %v1432 = vpop.f32.mrb[0].mxu0
        %v1433 = vadd.f32 %v1201, %v1432
        %v1434 = vpop.f32.mrb[0].mxu0
        %1435 = vdwg.mxu0
        %1436 = vmatprep.subr.bf16.mxu0 0
        %1437 = vmatpush1.bf16.msra.mxu0 %v1347
        %1438 = vmatprep.subr.bf16.mxu0 0
        %1439 = vmatpush1.bf16.msra.mxu0 %v1348
        %1440 = vmatprep.subr.bf16.mxu0 0
        %1441 = vmatpush1.bf16.msra.mxu0 %v1349
        %1442 = vmatprep.subr.bf16.mxu0 0
        %1443 = vmatpush1.bf16.msra.mxu0 %v1350
        %1444 = vmatprep.subr.bf16.mxu0 0
        %1445 = vmatpush1.bf16.msra.mxu0 %v1351
        %1446 = vmatprep.subr.bf16.mxu0 0
        %1447 = vmatpush1.bf16.msra.mxu0 %v1352
        %1448 = vmatprep.subr.bf16.mxu0 0
        %1449 = vmatpush1.bf16.msra.mxu0 %v1353
        %1450 = vmatprep.subr.bf16.mxu0 0
        %1451 = vmatpush1.bf16.msra.mxu0 %v1354
        %1452 = vmatprep.subr.bf16.mxu0 0
        %1453 = vmatpush1.bf16.msra.mxu0 %v1355
        %1454 = vmatprep.subr.bf16.mxu0 0
        %1455 = vmatpush1.bf16.msra.mxu0 %v1356
        %1456 = vmatprep.subr.bf16.mxu0 0
        %1457 = vmatpush1.bf16.msra.mxu0 %v1357
        %1458 = vmatprep.subr.bf16.mxu0 0
        %1459 = vmatpush1.bf16.msra.mxu0 %v1358
        %1460 = vmatprep.subr.bf16.mxu0 0
        %1461 = vmatpush1.bf16.msra.mxu0 %v1359
        %1462 = vmatprep.subr.bf16.mxu0 0
        %1463 = vmatpush1.bf16.msra.mxu0 %v1360
        %1464 = vmatprep.subr.bf16.mxu0 0
        %1465 = vmatpush1.bf16.msra.mxu0 %v1361
        %1466 = vmatprep.subr.bf16.mxu0 0
        %1467 = vmatpush1.bf16.msra.mxu0 %v1362
        %1468 = vmatprep.mubr.bf16.mxu0 %v1131
        %1469 = vmatmul.mubr.bf16.gmra.mrb[0].mxu0 %v1130
        %v1470 = vpop.f32.mrb[0].mxu0
        %v1471 = vadd.f32 %v1430, %v1470
        %v1472 = vpop.f32.mrb[0].mxu0
        %v1473 = vpop.f32.mrb[0].mxu0
        %v1474 = vadd.f32 %v1433, %v1473
        %v1475 = vpop.f32.mrb[0].mxu0
        %1476 = vdwg.mxu0
        %v1477 = vadd.f32 %v1471, 0.0
        %v1478 = vadd.f32 %v1474, 0.0
        %vm1479 = vcmask 64512
        %v1480 = vsel %vm1479, %v1477, -inf
        %v1481 = vsel %vm1479, %v1478, -inf
        %v1482 = vmax.f32 %v1480, %v1481
        %v1483 = vrot.slane %v1482, 4
        %v1484 = vmax.f32 %v1482, %v1483
        %v1485 = vrot.slane %v1484, 2
        %v1486 = vmax.f32 %v1484, %v1485
        %v1487 = vrot.slane %v1486, 1
        %v1488 = vmax.f32 %v1486, %v1487
        %v1489 = vsub.f32 %v1477, %v1488
        %v1490 = vsub.f32 %v1478, %v1488
        %v1491 = vmul.f32 %v1489, 1.442695
        %v1492 = vpow.pop %v1491
        %v1493 = vmul.f32 %v1490, 1.442695
        %v1494 = vpow.pop %v1493
        %v1495 = vsel %vm1479, %v1492, 0.0
        %v1496 = vsel %vm1479, %v1494, 0.0
        %v1497 = vadd.f32 %v1495, %v1496
        %v1498 = vrot.slane %v1497, 4
        %v1499 = vadd.f32 %v1497, %v1498
        %v1500 = vrot.slane %v1499, 2
        %v1501 = vadd.f32 %v1499, %v1500
        %v1502 = vrot.slane %v1501, 1
        %v1503 = vadd.f32 %v1501, %v1502
        %v1504 = vlog2.pop %v1503
        %v1505 = vmul.f32 %v1504, 0.6931472
        %v1506 = vadd.f32 %v1505, %v1488
        %v1507 = vsub.f32 -3.1780539, %v1506
        %v1508 = vlog2.pop 16.0
        %v1509 = vmul.f32 %v1508, 0.6931472
        %v1510 = vadd.f32 %v1509, 0.0
        %v1511 = vstv %s440
        %v1512 = vadd.f32 %v1511, %v1510
        %v1513 = vsub.f32 -1.0986123, %v1512
        %v1514 = vadd.f32 %v1471, %v1507
        %v1515 = vadd.f32 %v1474, %v1507
        %v1516 = vsel %vm1479, %v1514, -inf
        %1517 = vmax.xlane.f32.xlu0 %v1516
        %v1518 = vpop.xlane.xlu0 %1517
        %v1519 = vsel %vm1479, %v1515, -inf
        %1520 = vmax.xlane.f32.xlu0 %v1519
        %v1521 = vpop.xlane.xlu0 %1520
        %v1522 = vsub.f32 %v1514, %v1518
        %v1523 = vsub.f32 %v1515, %v1521
        %v1524 = vmul.f32 %v1522, 1.442695
        %v1525 = vpow.pop %v1524
        %v1526 = vmul.f32 %v1523, 1.442695
        %v1527 = vpow.pop %v1526
        %v1528 = vsel %vm1479, %v1525, 0.0
        %1529 = vadd.xlane.f32.xlu0 %v1528
        %v1530 = vpop.xlane.xlu0 %1529
        %v1531 = vsel %vm1479, %v1527, 0.0
        %1532 = vadd.xlane.f32.xlu0 %v1531
        %v1533 = vpop.xlane.xlu0 %1532
        %v1534 = vlog2.pop %v1530
        %v1535 = vmul.f32 %v1534, 0.6931472
        %v1536 = vlog2.pop %v1533
        %v1537 = vmul.f32 %v1536, 0.6931472
        %v1538 = vadd.f32 %v1535, %v1518
        %v1539 = vadd.f32 %v1537, %v1521
        %v1540 = vadd.f32 %v1511, %v1513
        %v1541 = vmax.f32 %v1538, %v1540
        %v1542 = vmax.f32 %v1539, %v1540
        %v1543 = vsub.f32 %v1538, %v1541
        %v1544 = vsub.f32 %v1539, %v1542
        %v1545 = vmul.f32 %v1543, 1.442695
        %v1546 = vpow.pop %v1545
        %v1547 = vmul.f32 %v1544, 1.442695
        %v1548 = vpow.pop %v1547
        %v1549 = vsub.f32 %v1540, %v1541
        %v1550 = vsub.f32 %v1540, %v1542
        %v1551 = vmul.f32 %v1549, 1.442695
        %v1552 = vpow.pop %v1551
        %v1553 = vmul.f32 %v1550, 1.442695
        %v1554 = vpow.pop %v1553
        %v1555 = vadd.f32 %v1546, %v1552
        %v1556 = vadd.f32 %v1548, %v1554
        %v1557 = vlog2.pop %v1555
        %v1558 = vmul.f32 %v1557, 0.6931472
        %v1559 = vlog2.pop %v1556
        %v1560 = vmul.f32 %v1559, 0.6931472
        %v1561 = vadd.f32 %v1541, %v1558
        %v1562 = vadd.f32 %v1542, %v1560
        %v1563 = vsub.f32 -3.1780539, %v1561
        %v1564 = vsub.f32 -3.1780539, %v1562
        %v1565 = vadd.f32 %v1471, %v1563
        %v1566 = vadd.f32 %v1474, %v1564
        %v1567 = vsel %vm1479, %v1565, -inf
        %v1568 = vsel %vm1479, %v1566, -inf
        %v1569 = vmax.f32 %v1567, %v1568
        %v1570 = vrot.slane %v1569, 4
        %v1571 = vmax.f32 %v1569, %v1570
        %v1572 = vrot.slane %v1571, 2
        %v1573 = vmax.f32 %v1571, %v1572
        %v1574 = vrot.slane %v1573, 1
        %v1575 = vmax.f32 %v1573, %v1574
        %v1576 = vsub.f32 %v1565, %v1575
        %v1577 = vsub.f32 %v1566, %v1575
        %v1578 = vmul.f32 %v1576, 1.442695
        %v1579 = vpow.pop %v1578
        %v1580 = vmul.f32 %v1577, 1.442695
        %v1581 = vpow.pop %v1580
        %v1582 = vsel %vm1479, %v1579, 0.0
        %v1583 = vsel %vm1479, %v1581, 0.0
        %v1584 = vadd.f32 %v1582, %v1583
        %v1585 = vrot.slane %v1584, 4
        %v1586 = vadd.f32 %v1584, %v1585
        %v1587 = vrot.slane %v1586, 2
        %v1588 = vadd.f32 %v1586, %v1587
        %v1589 = vrot.slane %v1588, 1
        %v1590 = vadd.f32 %v1588, %v1589
        %v1591 = vlog2.pop %v1590
        %v1592 = vmul.f32 %v1591, 0.6931472
        %v1593 = vadd.f32 %v1592, %v1575
        %v1594 = vsub.f32 -3.1780539, %v1593
        %v1595 = vmax.f32 %v1563, %v1564
        %v1596 = vrot.slane %v1595, 4
        %v1597 = vmax.f32 %v1595, %v1596
        %v1598 = vrot.slane %v1597, 2
        %v1599 = vmax.f32 %v1597, %v1598
        %v1600 = vrot.slane %v1599, 1
        %v1601 = vmax.f32 %v1599, %v1600
        %v1602 = vsub.f32 %v1563, %v1601
        %v1603 = vsub.f32 %v1564, %v1601
        %v1604 = vmul.f32 %v1602, 1.442695
        %v1605 = vpow.pop %v1604
        %v1606 = vmul.f32 %v1603, 1.442695
        %v1607 = vpow.pop %v1606
        %v1608 = vadd.f32 %v1605, %v1607
        %v1609 = vrot.slane %v1608, 4
        %v1610 = vadd.f32 %v1608, %v1609
        %v1611 = vrot.slane %v1610, 2
        %v1612 = vadd.f32 %v1610, %v1611
        %v1613 = vrot.slane %v1612, 1
        %v1614 = vadd.f32 %v1612, %v1613
        %v1615 = vlog2.pop %v1614
        %v1616 = vmul.f32 %v1615, 0.6931472
        %v1617 = vadd.f32 %v1616, %v1601
        %v1618 = vadd.f32 %v1511, %v1617
        %v1619 = vsub.f32 -1.0986123, %v1618
        %v1620 = vadd.f32 %v1471, %v1594
        %v1621 = vadd.f32 %v1474, %v1594
        %v1622 = vsel %vm1479, %v1620, -inf
        %1623 = vmax.xlane.f32.xlu0 %v1622
        %v1624 = vpop.xlane.xlu0 %1623
        %v1625 = vsel %vm1479, %v1621, -inf
        %1626 = vmax.xlane.f32.xlu0 %v1625
        %v1627 = vpop.xlane.xlu0 %1626
        %v1628 = vsub.f32 %v1620, %v1624
        %v1629 = vsub.f32 %v1621, %v1627
        %v1630 = vmul.f32 %v1628, 1.442695
        %v1631 = vpow.pop %v1630
        %v1632 = vmul.f32 %v1629, 1.442695
        %v1633 = vpow.pop %v1632
        %v1634 = vsel %vm1479, %v1631, 0.0
        %1635 = vadd.xlane.f32.xlu0 %v1634
        %v1636 = vpop.xlane.xlu0 %1635
        %v1637 = vsel %vm1479, %v1633, 0.0
        %1638 = vadd.xlane.f32.xlu0 %v1637
        %v1639 = vpop.xlane.xlu0 %1638
        %v1640 = vlog2.pop %v1636
        %v1641 = vmul.f32 %v1640, 0.6931472
        %v1642 = vlog2.pop %v1639
        %v1643 = vmul.f32 %v1642, 0.6931472
        %v1644 = vadd.f32 %v1641, %v1624
        %v1645 = vadd.f32 %v1643, %v1627
        %v1646 = vadd.f32 %v1511, %v1619
        %v1647 = vmax.f32 %v1644, %v1646
        %v1648 = vmax.f32 %v1645, %v1646
        %v1649 = vsub.f32 %v1644, %v1647
        %v1650 = vsub.f32 %v1645, %v1648
        %v1651 = vmul.f32 %v1649, 1.442695
        %v1652 = vpow.pop %v1651
        %v1653 = vmul.f32 %v1650, 1.442695
        %v1654 = vpow.pop %v1653
        %v1655 = vsub.f32 %v1646, %v1647
        %v1656 = vsub.f32 %v1646, %v1648
        %v1657 = vmul.f32 %v1655, 1.442695
        %v1658 = vpow.pop %v1657
        %v1659 = vmul.f32 %v1656, 1.442695
        %v1660 = vpow.pop %v1659
        %v1661 = vadd.f32 %v1652, %v1658
        %v1662 = vadd.f32 %v1654, %v1660
        %v1663 = vlog2.pop %v1661
        %v1664 = vmul.f32 %v1663, 0.6931472
        %v1665 = vlog2.pop %v1662
        %v1666 = vmul.f32 %v1665, 0.6931472
        %v1667 = vadd.f32 %v1647, %v1664
        %v1668 = vadd.f32 %v1648, %v1666
        %v1669 = vsub.f32 -3.1780539, %v1667
        %v1670 = vsub.f32 -3.1780539, %v1668
        %v1671 = vadd.f32 %v1471, %v1669
        %v1672 = vadd.f32 %v1474, %v1670
        %v1673 = vsel %vm1479, %v1671, -inf
        %v1674 = vsel %vm1479, %v1672, -inf
        %v1675 = vmax.f32 %v1673, %v1674
        %v1676 = vrot.slane %v1675, 4
        %v1677 = vmax.f32 %v1675, %v1676
        %v1678 = vrot.slane %v1677, 2
        %v1679 = vmax.f32 %v1677, %v1678
        %v1680 = vrot.slane %v1679, 1
        %v1681 = vmax.f32 %v1679, %v1680
        %v1682 = vsub.f32 %v1671, %v1681
        %v1683 = vsub.f32 %v1672, %v1681
        %v1684 = vmul.f32 %v1682, 1.442695
        %v1685 = vpow.pop %v1684
        %v1686 = vmul.f32 %v1683, 1.442695
        %v1687 = vpow.pop %v1686
        %v1688 = vsel %vm1479, %v1685, 0.0
        %v1689 = vsel %vm1479, %v1687, 0.0
        %v1690 = vadd.f32 %v1688, %v1689
        %v1691 = vrot.slane %v1690, 4
        %v1692 = vadd.f32 %v1690, %v1691
        %v1693 = vrot.slane %v1692, 2
        %v1694 = vadd.f32 %v1692, %v1693
        %v1695 = vrot.slane %v1694, 1
        %v1696 = vadd.f32 %v1694, %v1695
        %v1697 = vlog2.pop %v1696
        %v1698 = vmul.f32 %v1697, 0.6931472
        %v1699 = vadd.f32 %v1698, %v1681
        %v1700 = vsub.f32 -3.1780539, %v1699
        %v1701 = vmax.f32 %v1669, %v1670
        %v1702 = vrot.slane %v1701, 4
        %v1703 = vmax.f32 %v1701, %v1702
        %v1704 = vrot.slane %v1703, 2
        %v1705 = vmax.f32 %v1703, %v1704
        %v1706 = vrot.slane %v1705, 1
        %v1707 = vmax.f32 %v1705, %v1706
        %v1708 = vsub.f32 %v1669, %v1707
        %v1709 = vsub.f32 %v1670, %v1707
        %v1710 = vmul.f32 %v1708, 1.442695
        %v1711 = vpow.pop %v1710
        %v1712 = vmul.f32 %v1709, 1.442695
        %v1713 = vpow.pop %v1712
        %v1714 = vadd.f32 %v1711, %v1713
        %v1715 = vrot.slane %v1714, 4
        %v1716 = vadd.f32 %v1714, %v1715
        %v1717 = vrot.slane %v1716, 2
        %v1718 = vadd.f32 %v1716, %v1717
        %v1719 = vrot.slane %v1718, 1
        %v1720 = vadd.f32 %v1718, %v1719
        %v1721 = vlog2.pop %v1720
        %v1722 = vmul.f32 %v1721, 0.6931472
        %v1723 = vadd.f32 %v1722, %v1707
        %v1724 = vadd.f32 %v1511, %v1723
        %v1725 = vsub.f32 -1.0986123, %v1724
        %v1726 = vadd.f32 %v1471, %v1700
        %v1727 = vadd.f32 %v1474, %v1700
        %v1728 = vsel %vm1479, %v1726, -inf
        %1729 = vmax.xlane.f32.xlu0 %v1728
        %v1730 = vpop.xlane.xlu0 %1729
        %v1731 = vsel %vm1479, %v1727, -inf
        %1732 = vmax.xlane.f32.xlu0 %v1731
        %v1733 = vpop.xlane.xlu0 %1732
        %v1734 = vsub.f32 %v1726, %v1730
        %v1735 = vsub.f32 %v1727, %v1733
        %v1736 = vmul.f32 %v1734, 1.442695
        %v1737 = vpow.pop %v1736
        %v1738 = vmul.f32 %v1735, 1.442695
        %v1739 = vpow.pop %v1738
        %v1740 = vsel %vm1479, %v1737, 0.0
        %1741 = vadd.xlane.f32.xlu0 %v1740
        %v1742 = vpop.xlane.xlu0 %1741
        %v1743 = vsel %vm1479, %v1739, 0.0
        %1744 = vadd.xlane.f32.xlu0 %v1743
        %v1745 = vpop.xlane.xlu0 %1744
        %v1746 = vlog2.pop %v1742
        %v1747 = vmul.f32 %v1746, 0.6931472
        %v1748 = vlog2.pop %v1745
        %v1749 = vmul.f32 %v1748, 0.6931472
        %v1750 = vadd.f32 %v1747, %v1730
        %v1751 = vadd.f32 %v1749, %v1733
        %v1752 = vadd.f32 %v1511, %v1725
        %v1753 = vmax.f32 %v1750, %v1752
        %v1754 = vmax.f32 %v1751, %v1752
        %v1755 = vsub.f32 %v1750, %v1753
        %v1756 = vsub.f32 %v1751, %v1754
        %v1757 = vmul.f32 %v1755, 1.442695
        %v1758 = vpow.pop %v1757
        %v1759 = vmul.f32 %v1756, 1.442695
        %v1760 = vpow.pop %v1759
        %v1761 = vsub.f32 %v1752, %v1753
        %v1762 = vsub.f32 %v1752, %v1754
        %v1763 = vmul.f32 %v1761, 1.442695
        %v1764 = vpow.pop %v1763
        %v1765 = vmul.f32 %v1762, 1.442695
        %v1766 = vpow.pop %v1765
        %v1767 = vadd.f32 %v1758, %v1764
        %v1768 = vadd.f32 %v1760, %v1766
        %v1769 = vlog2.pop %v1767
        %v1770 = vmul.f32 %v1769, 0.6931472
        %v1771 = vlog2.pop %v1768
        %v1772 = vmul.f32 %v1771, 0.6931472
        %v1773 = vadd.f32 %v1753, %v1770
        %v1774 = vadd.f32 %v1754, %v1772
        %v1775 = vsub.f32 -3.1780539, %v1773
        %v1776 = vsub.f32 -3.1780539, %v1774
        %v1777 = vadd.f32 %v1730, %v1775
        %v1778 = vadd.f32 %v1733, %v1776
        %v1779 = vsub.f32 %v1777, -3.1780539
        %v1780 = vsub.f32 %v1778, -3.1780539
        %v1781 = vmul.f32 %v1779, 1.442695
        %v1782 = vpow.pop %v1781
        %v1783 = vmul.f32 %v1780, 1.442695
        %v1784 = vpow.pop %v1783
        %v1785 = vmul.f32 %v1737, %v1782
        %v1786 = vmul.f32 %v1739, %v1784
        %v1787 = vpack.c.bf16 %v1786, %v1785
        %1788 = vxpose.xlu0.c.b16.start [1/8] %v1787, 128
        %1789 = vxpose.xlu0.c.b16.cont [2/8] 0, 128
        %1790 = vxpose.xlu0.c.b16.cont [3/8] 0, 128
        %1791 = vxpose.xlu0.c.b16.cont [4/8] 0, 128
        %1792 = vxpose.xlu0.c.b16.cont [5/8] 0, 128
        %1793 = vxpose.xlu0.c.b16.cont [6/8] 0, 128
        %1794 = vxpose.xlu0.c.b16.cont [7/8] 0, 128
        %1795 = vxpose.xlu0.c.b16.end [8/8] 0, 128
        %v1796 = vpop.trf.xlu0
        %v1797 = vpop.trf.xlu0
        %v1798 = vpop.trf.xlu0
        %v1799 = vpop.trf.xlu0
        %v1800 = vpop.trf.xlu0
        %v1801 = vpop.trf.xlu0
        %v1802 = vpop.trf.xlu0
        %v1803 = vpop.trf.xlu0
        %vm1804 = vcmask 130048
        %v1806 = vsel %vm1804, %v1796, 0
        %1808 = vmatprep.subr.bf16.mxu0 0
        %1809 = vmatpush1.bf16.msra.mxu0 %v963
        %1810 = vmatprep.subr.bf16.mxu0 0
        %1811 = vmatpush1.bf16.msra.mxu0 0
        %1812 = vmatprep.subr.bf16.mxu0 0
        %1813 = vmatpush1.bf16.msra.mxu0 0
        %1814 = vmatprep.subr.bf16.mxu0 0
        %1815 = vmatpush1.bf16.msra.mxu0 0
        %1816 = vmatprep.subr.bf16.mxu0 0
        %1817 = vmatpush1.bf16.msra.mxu0 0
        %1818 = vmatprep.subr.bf16.mxu0 0
        %1819 = vmatpush1.bf16.msra.mxu0 0
        %1820 = vmatprep.subr.bf16.mxu0 0
        %1821 = vmatpush1.bf16.msra.mxu0 0
        %1822 = vmatprep.subr.bf16.mxu0 0
        %1823 = vmatpush1.bf16.msra.mxu0 0
        %1824 = vmatprep.subr.bf16.mxu0 0
        %1825 = vmatpush1.bf16.msra.mxu0 0
        %1826 = vmatprep.subr.bf16.mxu0 0
        %1827 = vmatpush1.bf16.msra.mxu0 0
        %1828 = vmatprep.subr.bf16.mxu0 0
        %1829 = vmatpush1.bf16.msra.mxu0 0
        %1830 = vmatprep.subr.bf16.mxu0 0
        %1831 = vmatpush1.bf16.msra.mxu0 0
        %1832 = vmatprep.subr.bf16.mxu0 0
        %1833 = vmatpush1.bf16.msra.mxu0 0
        %1834 = vmatprep.subr.bf16.mxu0 0
        %1835 = vmatpush1.bf16.msra.mxu0 0
        %1836 = vmatprep.subr.bf16.mxu0 0
        %1837 = vmatpush1.bf16.msra.mxu0 0
        %1838 = vmatprep.subr.bf16.mxu0 0
        %1839 = vmatpush1.bf16.msra.mxu0 0
        %1840 = vmatprep.mubr.bf16.mxu0 0
        %1841 = vmatmul.mubr.bf16.gmra.mrb[0].mxu0 %v1806
        %v1842 = vpop.f32.mrb[0].mxu0
        %v1843 = vadd.f32 0.0, %v1842
        %v1844 = vpop.f32.mrb[0].mxu0
        %v1845 = vpop.f32.mrb[0].mxu0
        %v1846 = vpop.f32.mrb[0].mxu0
        %1847 = vdwg.mxu0
        %v1848 = vmul.f32 %v1843, %v1843
        %v1849 = vsel %vm1804, %v1848, 0.0
        %1850 = vadd.xlane.f32.xlu0 %v1849
        %v1851 = vpop.xlane.xlu0 %1850
        %v1852 = vmax.f32 %v1851, 1e-24
        %v1853 = vrsqrt.pop %v1852
        %v1854 = vmul.f32 %v1843, %v1853
        %v1855 = vld [vmem:[%s436] sm:$0x1]
        %v1856 = vmul.f32 %v1855, %v1855
        %vm1857 = vcmask 57344
        %v1858 = vsel %vm1857, %v1856, 0.0
        %1859 = vadd.xlane.f32.xlu0 %v1858
        %v1860 = vpop.xlane.xlu0 %1859
        %v1861 = vmax.f32 %v1860, 1e-24
        %v1862 = vrsqrt.pop %v1861
        %v1863 = vmul.f32 %v1855, %v1862
        %v1864 = vmul.f32 %v1854, %v1854
        %v1865 = vsel %vm1804, %v1864, 0.0
        %1866 = vadd.xlane.f32.xlu0 %v1865
        %v1867 = vpop.xlane.xlu0 %1866
        %v1868 = vrot.slane %v1867, 4
        %v1869 = vadd.f32 %v1867, %v1868
        %v1870 = vrot.slane %v1869, 2
        %v1871 = vadd.f32 %v1869, %v1870
        %v1872 = vrot.slane %v1871, 1
        %v1873 = vadd.f32 %v1871, %v1872
        %v1874 = vmul.f32 %v1863, %v1863
        %v1875 = vsel %vm1857, %v1874, 0.0
        %1876 = vadd.xlane.f32.xlu0 %v1875
        %v1877 = vpop.xlane.xlu0 %1876
        %v1878 = vadd.f32 %v1877, %v1873
        %v1879 = vmax.f32 %v1878, 1e-24
        %v1880 = vrsqrt.pop %v1879
        %v1881 = vmul.f32 %v1863, %v1880
        %1882 = vst.msk [vmem:[%s421] sm:$0x1] %vm1857, %v1881
        %v1883 = vlaneseq
        %v1884 = vshrl.u32 %v1883, 7
        %v1885 = vsub.s32 0, %v1884
        %v1886 = vrot.slane %v1880, %v1885
        %v1887 = vmul.f32 %v1854, %v1886
        %1888 = vst.msk [vmem:[%s428] sm:$0xff] %vm1804, %v1887
        %s1889 = sand.u32 %s280, 1
        %s1890 = scalar_lea.sflag [#allocation4], %s1889
        %s1891 = sand.u32 %s280, 1
        %s1892 = scalar_lea.vmem [#allocation3], %s1891
        %s1893 = sand.u32 %s306, 1
        %s1894 = scalar_lea.sflag [#allocation6], %s1893
        %s1895 = sand.u32 %s306, 1
        %s1896 = smul.addr %s1895, 8
        %s1897 = scalar_lea.vmem [#allocation5], %s1896
        // Predicated region
        $region65: #{tpu_custom_call.1} parent=63 // pred_check
          %p1898 = pneg %p290
        $region66: #{tpu_custom_call.1} parent=63 // pred_check_branch
          %1900 = sbr.rel (%p1898) target = $region68
        $region67: #{tpu_custom_call.1} parent=63 // pred_region
          %s1902 = ssub.s32 16, 16
          %1903 = vsyncadd %s1890, %s1902
          %s1904 = smul.addr %s31, 16
          %s1905 = scalar_lea.hbm %s11, %s1904
          %s1907 = sshll.u32 %s1892, 4
          %s1908 = int_to_ptr.vmem [resolvable:$true] %s1907
          %1910 = dma.vmem_to_hbm [thread:$0]  %s1908, 16, %s1905, %s1890
        $region68: #{tpu_custom_call.1} parent=63 // pred_fallthru
          _
        // Predicated region
        $region69: #{tpu_custom_call.1} parent=63 // pred_check
          %p1911 = pneg %p316
        $region70: #{tpu_custom_call.1} parent=63 // pred_check_branch
          %1913 = sbr.rel (%p1911) target = $region72
        $region71: #{tpu_custom_call.1} parent=63 // pred_region
          %s1915 = ssub.s32 128, 128
          %1916 = vsyncadd %s1894, %s1915
          %s1917 = smul.addr %s31, 128
          %s1918 = scalar_lea.hbm %s12, %s1917
          %s1920 = sshll.u32 %s1897, 4
          %s1921 = int_to_ptr.vmem [resolvable:$true] %s1920
          %1923 = dma.vmem_to_hbm [thread:$0]  %s1921, 128, %s1918, %s1894
        $region72: #{tpu_custom_call.1} parent=63 // pred_fallthru
          _
      $region64: #{tpu_custom_call.1} parent=5 // pred_fallthru
        _
      %p1924 = scmp.le.s32.totalorder 2, %s26
      // Predicated region
      $region73: #{tpu_custom_call.1} parent=5 // pred_check
        %p1925 = pneg %p1924
      $region74: #{tpu_custom_call.1} parent=5 // pred_check_branch
        %1927 = sbr.rel (%p1925) target = $region76
      $region75: #{tpu_custom_call.1} parent=5 // pred_region
        %s1928 = ssub.s32 %s26, 2
        // Predicated region
        $region77: #{tpu_custom_call.1} parent=75 // pred_check
          %p1929 = pneg %p296
        $region78: #{tpu_custom_call.1} parent=75 // pred_check_branch
          %1931 = sbr.rel (%p1929) target = $region80
        $region79: #{tpu_custom_call.1} parent=75 // pred_region
          %s1932 = sand.u32 %s281, 1
          %s1933 = scalar_lea.sflag [#allocation4], %s1932
          %s1934 = sand.u32 %s281, 1
          %s1935 = scalar_lea.vmem [#allocation3], %s1934
          %1936 = dma.done %s1933, 16
        $region80: #{tpu_custom_call.1} parent=75 // pred_fallthru
          _
        // Predicated region
        $region81: #{tpu_custom_call.1} parent=75 // pred_check
          %p1937 = pneg %p322
        $region82: #{tpu_custom_call.1} parent=75 // pred_check_branch
          %1939 = sbr.rel (%p1937) target = $region84
        $region83: #{tpu_custom_call.1} parent=75 // pred_region
          %s1940 = sand.u32 %s307, 1
          %s1941 = scalar_lea.sflag [#allocation6], %s1940
          %s1942 = sand.u32 %s307, 1
          %s1943 = smul.addr %s1942, 8
          %s1944 = scalar_lea.vmem [#allocation5], %s1943
          %1945 = dma.done %s1941, 128
        $region84: #{tpu_custom_call.1} parent=75 // pred_fallthru
          _
      $region76: #{tpu_custom_call.1} parent=5 // pred_fallthru
        _
    $region6: #{tpu_custom_call.1} parent=1 // loop_footer
      %s30 = sadd.s32 1, %s26
    $region7: #{tpu_custom_call.1} parent=1 // loop_footer_branch
      %25 = sbr.rel target = $region3
    $region8: #{tpu_custom_call.1} parent=1 // loop_exit
      _
    %1946 = vsyncpa [#allocation4], 1
    %s1947 = scalar_lea.sflag [#allocation4], 1
    %1948 = vsyncpa %s1947, 1
    %1949 = vsyncpa [#allocation6], 1
    %s1950 = scalar_lea.sflag [#allocation6], 1
    %1951 = vsyncpa %s1950, 1

</llo_original>
